<compile_context>
chip_gen: v6e
topology: v6e:2x2x1
jax: 0.10.0
libtpu: 0.0.40
codegen_flags: <defaults>
</compile_context>

<pallas_src>
import functools

import jax
import jax.numpy as jnp
from jax import lax
from jax.experimental import pallas as pl
from jax.experimental.pallas import tpu as pltpu

BN_EPS = 1e-5      # nn.BatchNorm1d default eps
NORM_EPS = 1e-12   # F.normalize default eps


# ---------------------------------------------------------------------------
# Fused kernel
# ---------------------------------------------------------------------------
def _byol_fused_kernel(
    x_ref,    # (2B, K)   rows [x1; x2]
    wb_ref,   # (K, 2F)   [backbone_online | backbone_target] along lanes
    bb_ref,   # (1, 2F)
    w1p_ref,  # (2F, 2H)  block-diag(projector1_online, projector1_target)
    v1p_ref,  # (3, 2H)   rows: bias1, gamma, beta   (online ‖ target)
    w2p_ref,  # (2H, 2P)  block-diag(projector2_online, projector2_target)
    b2p_ref,  # (1, 2P)
    w1q_ref,  # (P, H)    predictor layer1
    v1q_ref,  # (3, H)    rows: bias1, gamma, beta
    w2q_ref,  # (H, P)    predictor layer2
    b2q_ref,  # (1, P)
    o_ref,    # (1, 1)    SMEM scalar loss
    *, B, P,
):
    two_b = 2 * B
    row = lax.broadcasted_iota(jnp.int32, (two_b, 1), 0)
    is_view1 = row < B  # hoisted once; reused by both BN layers

    def bn_relu(h, gamma, beta):
        # Training-mode BatchNorm1d, biased variance, computed PER VIEW (each
        # view of B rows is a separate encoder call in the reference module).
        # Single-pass statistics: var = E[h^2] - E[h]^2 (clamped for fp safety).
        h1 = h[:B]
        h2 = h[B:]
        m1 = jnp.mean(h1, axis=0, keepdims=True)
        m2 = jnp.mean(h2, axis=0, keepdims=True)
        v1 = jnp.maximum(jnp.mean(h1 * h1, axis=0, keepdims=True) - m1 * m1, 0.0)
        v2 = jnp.maximum(jnp.mean(h2 * h2, axis=0, keepdims=True) - m2 * m2, 0.0)
        mean = jnp.where(is_view1, m1, m2)
        var = jnp.where(is_view1, v1, v2)
        hn = (h - mean) * lax.rsqrt(var + BN_EPS)
        return jnp.maximum(hn * gamma + beta, 0.0)

    # Backbone: online ‖ target fused along lanes -> one MXU pass, 2F lanes wide.
    feat = (jnp.dot(x_ref[...], wb_ref[...], preferred_element_type=jnp.float32)
            + bb_ref[...])

    # Projector MLP (online ⊕ target block-diagonal): Linear -> BN -> ReLU -> Linear
    h = (jnp.dot(feat, w1p_ref[...], preferred_element_type=jnp.float32)
         + v1p_ref[0:1, :])
    h = bn_relu(h, v1p_ref[1:2, :], v1p_ref[2:3, :])
    z = (jnp.dot(h, w2p_ref[...], preferred_element_type=jnp.float32)
         + b2p_ref[...])
    z_online = z[:, :P]   # (2B, P)  — P multiple of 128 => vreg-aligned split
    z_target = z[:, P:]   # (2B, P)

    # Predictor MLP (online branch only): Linear -> BN -> ReLU -> Linear
    hq = (jnp.dot(z_online, w1q_ref[...], preferred_element_type=jnp.float32)
          + v1q_ref[0:1, :])
    hq = bn_relu(hq, v1q_ref[1:2, :], v1q_ref[2:3, :])
    p = (jnp.dot(hq, w2q_ref[...], preferred_element_type=jnp.float32)
         + b2q_ref[...])

    # BYOL loss epilogue (fused; no HBM round-trip for p / z).
    def normalize(v):
        # F.normalize: v / max(||v||, eps)  ==  v * rsqrt(max(||v||^2, eps^2))
        ss = jnp.sum(v * v, axis=1, keepdims=True)
        return v * lax.rsqrt(jnp.maximum(ss, NORM_EPS * NORM_EPS))

    def mse(pa, zb):
        d = jnp.sum(normalize(pa) * normalize(zb), axis=1, keepdims=True)
        return 2.0 - 2.0 * jnp.mean(d)

    loss = 0.5 * mse(p[:B], z_target[B:]) + 0.5 * mse(p[B:], z_target[:B])
    o_ref[0, 0] = loss


# ---------------------------------------------------------------------------
# Wrapper
# ---------------------------------------------------------------------------
def _block_diag(a, b):
    ra, ca = a.shape
    rb, cb = b.shape
    top = jnp.concatenate([a, jnp.zeros((ra, cb), a.dtype)], axis=1)
    bot = jnp.concatenate([jnp.zeros((rb, ca), b.dtype), b], axis=1)
    return jnp.concatenate([top, bot], axis=0)


@jax.jit
def byol_forward(x, params, y=None):
    """x (and optional y): (B, C, H, W) float32. Returns scalar BYOL loss."""
    B = x.shape[0]
    # augment1 / augment2 treated as identity (see TODO above)
    x1 = x.reshape(B, -1).astype(jnp.float32)
    x2 = (y if y is not None else x).reshape(B, -1).astype(jnp.float32)
    X = jnp.concatenate([x1, x2], axis=0)          # (2B, K)

    wb, bb = params["backbone"]
    wbt, bbt = params["backbone_t"]
    w1o, b1o, go, beto, w2o, b2o = params["projector"]
    w1t, b1t, gt, bett, w2t, b2t = params["projector_t"]
    w1q, b1q, gq, betq, w2q, b2q = params["predictor"]
    P = w2o.shape[1]

    # Fuse online/target along the output (lane) axis — done once, tiny arrays.
    wb_cat = jnp.concatenate([wb, wbt], axis=1)                    # (K, 2F)
    bb_cat = jnp.concatenate([bb, bbt])[None, :]                   # (1, 2F)
    w1p = _block_diag(w1o, w1t)                                    # (2F, 2H)
    v1p = jnp.stack([jnp.concatenate([b1o, b1t]),
                     jnp.concatenate([go, gt]),
                     jnp.concatenate([beto, bett])], axis=0)       # (3, 2H)
    w2p = _block_diag(w2o, w2t)                                    # (2H, 2P)
    b2p = jnp.concatenate([b2o, b2t])[None, :]                     # (1, 2P)
    v1q = jnp.stack([b1q, gq, betq], axis=0)                       # (3, H)
    b2q_2d = b2q[None, :]                                          # (1, P)

    kernel = functools.partial(_byol_fused_kernel, B=B, P=P)
    out = pl.pallas_call(
        kernel,
        out_shape=jax.ShapeDtypeStruct((1, 1), jnp.float32),
        in_specs=[pl.BlockSpec(memory_space=pltpu.MemorySpace.VMEM)] * 11,
        out_specs=pl.BlockSpec(memory_space=pltpu.MemorySpace.SMEM),
        compiler_params=pltpu.CompilerParams(vmem_limit_bytes=64 << 20),
    )(X, wb_cat, bb_cat, w1p, v1p, w2p, b2p, w1q, v1q, w2q, b2q_2d)
    return out[0, 0]


# ---------------------------------------------------------------------------
# Pure-JAX reference (mirrors the PyTorch forward) for a sanity check
# ---------------------------------------------------------------------------
def _byol_reference(x, params, y=None):
    def linear(xx, w, b):
        return xx @ w + b

    def mlp(xx, pr):
        w1, b1, g, bt, w2, b2 = pr
        h = xx @ w1 + b1
        m = h.mean(0)
        v = ((h - m) ** 2).mean(0)
        hn = (h - m) / jnp.sqrt(v + BN_EPS) * g + bt
        return jnp.maximum(hn, 0.0) @ w2 + b2

    def enc(xx, bbp, pj):
        return mlp(linear(xx, *bbp), pj)

    def norm(v):
        n = jnp.linalg.norm(v, axis=1, keepdims=True)
        return v / jnp.maximum(n, NORM_EPS)

    def mse(p, z):
        return 2.0 - 2.0 * jnp.mean(jnp.sum(norm(p) * norm(z), axis=1))

    B = x.shape[0]
    x1 = x.reshape(B, -1)
    x2 = (y if y is not None else x).reshape(B, -1)
    z1o = enc(x1, params["backbone"], params["projector"])
    z2o = enc(x2, params["backbone"], params["projector"])
    p1 = mlp(z1o, params["predictor"])
    p2 = mlp(z2o, params["predictor"])
    z1t = enc(x1, params["backbone_t"], params["projector_t"])
    z2t = enc(x2, params["backbone_t"], params["projector_t"])
    return 0.5 * mse(p1, z2t) + 0.5 * mse(p2, z1t)


# ---------------------------------------------------------------------------
# Parameter init (deterministic, synthetic)
# ---------------------------------------------------------------------------
def init_linear(key, din, dout, scale=0.05):
    kw, kb = jax.random.split(key)
    w = scale * jax.random.normal(kw, (din, dout), jnp.float32)
    b = scale * jax.random.normal(kb, (dout,), jnp.float32)
    return w, b


def init_mlp(key, din, hidden, dout):
    k1, k2 = jax.random.split(key)
    w1, b1 = init_linear(k1, din, hidden)
    gamma = jnp.ones((hidden,), jnp.float32)
    beta = jnp.zeros((hidden,), jnp.float32)
    w2, b2 = init_linear(k2, hidden, dout)
    return (w1, b1, gamma, beta, w2, b2)


if __name__ == "__main__":
    # Small shapes consistent with the module's forward; all lane dims are
    # multiples of 128 so every in-kernel matmul / vector op is full-vreg.
    B, C, H, W = 8, 4, 16, 16            # B multiple of 8 keeps per-view rows tile-aligned
    feature_size = 128
    hidden_dim = 128
    projection_dim = 128

    key = jax.random.PRNGKey(0)
    kx, kb, kproj, kpred = jax.random.split(key, 4)

    x = jax.random.normal(kx, (B, C, H, W), jnp.float32)

    backbone = init_linear(kb, C * H * W, feature_size)
    projector = init_mlp(kproj, feature_size, hidden_dim, projection_dim)
    predictor = init_mlp(kpred, projection_dim, hidden_dim, projection_dim)

    params = {
        "backbone": backbone,
        "projector": projector,
        "predictor": predictor,
        # target encoder = exact copy of the online encoder (per _init_target_encoder)
        "backbone_t": tuple(jnp.array(p) for p in backbone),
        "projector_t": tuple(jnp.array(p) for p in projector),
    }

    loss = byol_forward(x, params)
    jax.block_until_ready(loss)
    assert loss.shape == () and jnp.isfinite(loss)

    ref = _byol_reference(x, params)
    assert jnp.allclose(loss, ref, rtol=2e-3, atol=2e-3), (loss, ref)

    print("KERNEL_OK")
</pallas_src>

<mosaic_0001>
module attributes {stable_mosaic.version = 11 : i64} {
  func.func @_byol_fused_kernel(%arg0: memref<16x1024xf32, #tpu.memory_space<vmem>>, %arg1: memref<1024x256xf32, #tpu.memory_space<vmem>>, %arg2: memref<1x256xf32, #tpu.memory_space<vmem>>, %arg3: memref<256x256xf32, #tpu.memory_space<vmem>>, %arg4: memref<3x256xf32, #tpu.memory_space<vmem>>, %arg5: memref<256x256xf32, #tpu.memory_space<vmem>>, %arg6: memref<1x256xf32, #tpu.memory_space<vmem>>, %arg7: memref<128x128xf32, #tpu.memory_space<vmem>>, %arg8: memref<3x128xf32, #tpu.memory_space<vmem>>, %arg9: memref<128x128xf32, #tpu.memory_space<vmem>>, %arg10: memref<1x128xf32, #tpu.memory_space<vmem>>, %arg11: memref<1x1xf32, #tpu.memory_space<smem>>) attributes {dimension_semantics = [], scalar_prefetch = 0 : i64, scratch_operands = 0 : i64, tpu.core_type = #tpu.core_type<tc>} {
    %0 = tpu.iota {dimensions = array<i32: 0>} : vector<16x1xi32>
    %c8_i32 = arith.constant 8 : i32
    %1 = vector.broadcast %c8_i32 : i32 to vector<16x1xi32>
    %2 = arith.cmpi slt, %0, %1 : vector<16x1xi32>
    %c0 = arith.constant 0 : index
    %c0_0 = arith.constant 0 : index
    %3 = vector.load %arg0[%c0, %c0_0] : memref<16x1024xf32, #tpu.memory_space<vmem>>, vector<16x1024xf32>
    %c0_1 = arith.constant 0 : index
    %c0_2 = arith.constant 0 : index
    %4 = vector.load %arg1[%c0_1, %c0_2] : memref<1024x256xf32, #tpu.memory_space<vmem>>, vector<1024x256xf32>
    %cst = arith.constant dense<0.000000e+00> : vector<16x256xf32>
    %5 = tpu.matmul %3, %4, %cst {dimension_numbers = #tpu.dot_dimension_numbers<[1], [0], [0], [1], [0, 0, 1, 1], [], []>} : vector<16x1024xf32>, vector<1024x256xf32>, vector<16x256xf32> -> vector<16x256xf32>
    %c0_3 = arith.constant 0 : index
    %c0_4 = arith.constant 0 : index
    %6 = vector.load %arg2[%c0_3, %c0_4] : memref<1x256xf32, #tpu.memory_space<vmem>>, vector<1x256xf32>
    %7 = vector.broadcast %6 : vector<1x256xf32> to vector<16x256xf32>
    %8 = arith.addf %5, %7 : vector<16x256xf32>
    %c0_5 = arith.constant 0 : index
    %c0_6 = arith.constant 0 : index
    %9 = vector.load %arg3[%c0_5, %c0_6] : memref<256x256xf32, #tpu.memory_space<vmem>>, vector<256x256xf32>
    %cst_7 = arith.constant dense<0.000000e+00> : vector<16x256xf32>
    %10 = tpu.matmul %8, %9, %cst_7 {dimension_numbers = #tpu.dot_dimension_numbers<[1], [0], [0], [1], [0, 0, 1, 1], [], []>} : vector<16x256xf32>, vector<256x256xf32>, vector<16x256xf32> -> vector<16x256xf32>
    %c0_8 = arith.constant 0 : index
    %c0_9 = arith.constant 0 : index
    %11 = vector.load %arg4[%c0_8, %c0_9] : memref<3x256xf32, #tpu.memory_space<vmem>>, vector<1x256xf32>
    %12 = vector.broadcast %11 : vector<1x256xf32> to vector<16x256xf32>
    %13 = arith.addf %10, %12 : vector<16x256xf32>
    %c1 = arith.constant 1 : index
    %c0_10 = arith.constant 0 : index
    %14 = vector.load %arg4[%c1, %c0_10] : memref<3x256xf32, #tpu.memory_space<vmem>>, vector<1x256xf32>
    %c2 = arith.constant 2 : index
    %c0_11 = arith.constant 0 : index
    %15 = vector.load %arg4[%c2, %c0_11] : memref<3x256xf32, #tpu.memory_space<vmem>>, vector<1x256xf32>
    %16 = vector.extract_strided_slice %13 {offsets = [0, 0], sizes = [8, 256], strides = [1, 1]} : vector<16x256xf32> to vector<8x256xf32>
    %17 = vector.extract_strided_slice %13 {offsets = [8, 0], sizes = [8, 256], strides = [1, 1]} : vector<16x256xf32> to vector<8x256xf32>
    %cst_12 = arith.constant dense<0.000000e+00> : vector<256xf32>
    %18 = vector.multi_reduction <add>, %16, %cst_12 [0] : vector<8x256xf32> to vector<256xf32>
    %19 = vector.shape_cast %18 : vector<256xf32> to vector<1x256xf32>
    %cst_13 = arith.constant 8.000000e+00 : f32
    %20 = vector.broadcast %cst_13 : f32 to vector<1x256xf32>
    %21 = arith.divf %19, %20 : vector<1x256xf32>
    %cst_14 = arith.constant dense<0.000000e+00> : vector<256xf32>
    %22 = vector.multi_reduction <add>, %17, %cst_14 [0] : vector<8x256xf32> to vector<256xf32>
    %23 = vector.shape_cast %22 : vector<256xf32> to vector<1x256xf32>
    %cst_15 = arith.constant 8.000000e+00 : f32
    %24 = vector.broadcast %cst_15 : f32 to vector<1x256xf32>
    %25 = arith.divf %23, %24 : vector<1x256xf32>
    %26 = arith.mulf %16, %16 : vector<8x256xf32>
    %cst_16 = arith.constant dense<0.000000e+00> : vector<256xf32>
    %27 = vector.multi_reduction <add>, %26, %cst_16 [0] : vector<8x256xf32> to vector<256xf32>
    %28 = vector.shape_cast %27 : vector<256xf32> to vector<1x256xf32>
    %cst_17 = arith.constant 8.000000e+00 : f32
    %29 = vector.broadcast %cst_17 : f32 to vector<1x256xf32>
    %30 = arith.divf %28, %29 : vector<1x256xf32>
    %31 = arith.mulf %21, %21 : vector<1x256xf32>
    %32 = arith.subf %30, %31 : vector<1x256xf32>
    %cst_18 = arith.constant 0.000000e+00 : f32
    %33 = vector.broadcast %cst_18 : f32 to vector<1x256xf32>
    %34 = arith.maximumf %32, %33 : vector<1x256xf32>
    %35 = arith.mulf %17, %17 : vector<8x256xf32>
    %cst_19 = arith.constant dense<0.000000e+00> : vector<256xf32>
    %36 = vector.multi_reduction <add>, %35, %cst_19 [0] : vector<8x256xf32> to vector<256xf32>
    %37 = vector.shape_cast %36 : vector<256xf32> to vector<1x256xf32>
    %cst_20 = arith.constant 8.000000e+00 : f32
    %38 = vector.broadcast %cst_20 : f32 to vector<1x256xf32>
    %39 = arith.divf %37, %38 : vector<1x256xf32>
    %40 = arith.mulf %25, %25 : vector<1x256xf32>
    %41 = arith.subf %39, %40 : vector<1x256xf32>
    %cst_21 = arith.constant 0.000000e+00 : f32
    %42 = vector.broadcast %cst_21 : f32 to vector<1x256xf32>
    %43 = arith.maximumf %41, %42 : vector<1x256xf32>
    %44 = vector.shape_cast %2 : vector<16x1xi1> to vector<16x1xi1>
    %45 = vector.broadcast %44 : vector<16x1xi1> to vector<16x256xi1>
    %46 = vector.shape_cast %21 : vector<1x256xf32> to vector<1x256xf32>
    %47 = vector.broadcast %46 : vector<1x256xf32> to vector<16x256xf32>
    %48 = vector.shape_cast %25 : vector<1x256xf32> to vector<1x256xf32>
    %49 = vector.broadcast %48 : vector<1x256xf32> to vector<16x256xf32>
    %50 = arith.select %45, %47, %49 : vector<16x256xi1>, vector<16x256xf32>
    %51 = vector.shape_cast %2 : vector<16x1xi1> to vector<16x1xi1>
    %52 = vector.broadcast %51 : vector<16x1xi1> to vector<16x256xi1>
    %53 = vector.shape_cast %34 : vector<1x256xf32> to vector<1x256xf32>
    %54 = vector.broadcast %53 : vector<1x256xf32> to vector<16x256xf32>
    %55 = vector.shape_cast %43 : vector<1x256xf32> to vector<1x256xf32>
    %56 = vector.broadcast %55 : vector<1x256xf32> to vector<16x256xf32>
    %57 = arith.select %52, %54, %56 : vector<16x256xi1>, vector<16x256xf32>
    %58 = arith.subf %13, %50 : vector<16x256xf32>
    %cst_22 = arith.constant 9.99999974E-6 : f32
    %59 = vector.broadcast %cst_22 : f32 to vector<16x256xf32>
    %60 = arith.addf %57, %59 : vector<16x256xf32>
    %61 = math.rsqrt %60 : vector<16x256xf32>
    %62 = arith.mulf %58, %61 : vector<16x256xf32>
    %63 = vector.broadcast %14 : vector<1x256xf32> to vector<16x256xf32>
    %64 = arith.mulf %62, %63 : vector<16x256xf32>
    %65 = vector.broadcast %15 : vector<1x256xf32> to vector<16x256xf32>
    %66 = arith.addf %64, %65 : vector<16x256xf32>
    %cst_23 = arith.constant 0.000000e+00 : f32
    %67 = vector.broadcast %cst_23 : f32 to vector<16x256xf32>
    %68 = arith.maximumf %66, %67 : vector<16x256xf32>
    %c0_24 = arith.constant 0 : index
    %c0_25 = arith.constant 0 : index
    %69 = vector.load %arg5[%c0_24, %c0_25] : memref<256x256xf32, #tpu.memory_space<vmem>>, vector<256x256xf32>
    %cst_26 = arith.constant dense<0.000000e+00> : vector<16x256xf32>
    %70 = tpu.matmul %68, %69, %cst_26 {dimension_numbers = #tpu.dot_dimension_numbers<[1], [0], [0], [1], [0, 0, 1, 1], [], []>} : vector<16x256xf32>, vector<256x256xf32>, vector<16x256xf32> -> vector<16x256xf32>
    %c0_27 = arith.constant 0 : index
    %c0_28 = arith.constant 0 : index
    %71 = vector.load %arg6[%c0_27, %c0_28] : memref<1x256xf32, #tpu.memory_space<vmem>>, vector<1x256xf32>
    %72 = vector.broadcast %71 : vector<1x256xf32> to vector<16x256xf32>
    %73 = arith.addf %70, %72 : vector<16x256xf32>
    %74 = vector.extract_strided_slice %73 {offsets = [0, 0], sizes = [16, 128], strides = [1, 1]} : vector<16x256xf32> to vector<16x128xf32>
    %75 = vector.extract_strided_slice %73 {offsets = [0, 128], sizes = [16, 128], strides = [1, 1]} : vector<16x256xf32> to vector<16x128xf32>
    %c0_29 = arith.constant 0 : index
    %c0_30 = arith.constant 0 : index
    %76 = vector.load %arg7[%c0_29, %c0_30] : memref<128x128xf32, #tpu.memory_space<vmem>>, vector<128x128xf32>
    %cst_31 = arith.constant dense<0.000000e+00> : vector<16x128xf32>
    %77 = tpu.matmul %74, %76, %cst_31 {dimension_numbers = #tpu.dot_dimension_numbers<[1], [0], [0], [1], [0, 0, 1, 1], [], []>} : vector<16x128xf32>, vector<128x128xf32>, vector<16x128xf32> -> vector<16x128xf32>
    %c0_32 = arith.constant 0 : index
    %c0_33 = arith.constant 0 : index
    %78 = vector.load %arg8[%c0_32, %c0_33] : memref<3x128xf32, #tpu.memory_space<vmem>>, vector<1x128xf32>
    %79 = vector.broadcast %78 : vector<1x128xf32> to vector<16x128xf32>
    %80 = arith.addf %77, %79 : vector<16x128xf32>
    %c1_34 = arith.constant 1 : index
    %c0_35 = arith.constant 0 : index
    %81 = vector.load %arg8[%c1_34, %c0_35] : memref<3x128xf32, #tpu.memory_space<vmem>>, vector<1x128xf32>
    %c2_36 = arith.constant 2 : index
    %c0_37 = arith.constant 0 : index
    %82 = vector.load %arg8[%c2_36, %c0_37] : memref<3x128xf32, #tpu.memory_space<vmem>>, vector<1x128xf32>
    %83 = vector.extract_strided_slice %80 {offsets = [0, 0], sizes = [8, 128], strides = [1, 1]} : vector<16x128xf32> to vector<8x128xf32>
    %84 = vector.extract_strided_slice %80 {offsets = [8, 0], sizes = [8, 128], strides = [1, 1]} : vector<16x128xf32> to vector<8x128xf32>
    %cst_38 = arith.constant dense<0.000000e+00> : vector<128xf32>
    %85 = vector.multi_reduction <add>, %83, %cst_38 [0] : vector<8x128xf32> to vector<128xf32>
    %86 = vector.shape_cast %85 : vector<128xf32> to vector<1x128xf32>
    %cst_39 = arith.constant 8.000000e+00 : f32
    %87 = vector.broadcast %cst_39 : f32 to vector<1x128xf32>
    %88 = arith.divf %86, %87 : vector<1x128xf32>
    %cst_40 = arith.constant dense<0.000000e+00> : vector<128xf32>
    %89 = vector.multi_reduction <add>, %84, %cst_40 [0] : vector<8x128xf32> to vector<128xf32>
    %90 = vector.shape_cast %89 : vector<128xf32> to vector<1x128xf32>
    %cst_41 = arith.constant 8.000000e+00 : f32
    %91 = vector.broadcast %cst_41 : f32 to vector<1x128xf32>
    %92 = arith.divf %90, %91 : vector<1x128xf32>
    %93 = arith.mulf %83, %83 : vector<8x128xf32>
    %cst_42 = arith.constant dense<0.000000e+00> : vector<128xf32>
    %94 = vector.multi_reduction <add>, %93, %cst_42 [0] : vector<8x128xf32> to vector<128xf32>
    %95 = vector.shape_cast %94 : vector<128xf32> to vector<1x128xf32>
    %cst_43 = arith.constant 8.000000e+00 : f32
    %96 = vector.broadcast %cst_43 : f32 to vector<1x128xf32>
    %97 = arith.divf %95, %96 : vector<1x128xf32>
    %98 = arith.mulf %88, %88 : vector<1x128xf32>
    %99 = arith.subf %97, %98 : vector<1x128xf32>
    %cst_44 = arith.constant 0.000000e+00 : f32
    %100 = vector.broadcast %cst_44 : f32 to vector<1x128xf32>
    %101 = arith.maximumf %99, %100 : vector<1x128xf32>
    %102 = arith.mulf %84, %84 : vector<8x128xf32>
    %cst_45 = arith.constant dense<0.000000e+00> : vector<128xf32>
    %103 = vector.multi_reduction <add>, %102, %cst_45 [0] : vector<8x128xf32> to vector<128xf32>
    %104 = vector.shape_cast %103 : vector<128xf32> to vector<1x128xf32>
    %cst_46 = arith.constant 8.000000e+00 : f32
    %105 = vector.broadcast %cst_46 : f32 to vector<1x128xf32>
    %106 = arith.divf %104, %105 : vector<1x128xf32>
    %107 = arith.mulf %92, %92 : vector<1x128xf32>
    %108 = arith.subf %106, %107 : vector<1x128xf32>
    %cst_47 = arith.constant 0.000000e+00 : f32
    %109 = vector.broadcast %cst_47 : f32 to vector<1x128xf32>
    %110 = arith.maximumf %108, %109 : vector<1x128xf32>
    %111 = vector.shape_cast %2 : vector<16x1xi1> to vector<16x1xi1>
    %112 = vector.broadcast %111 : vector<16x1xi1> to vector<16x128xi1>
    %113 = vector.shape_cast %88 : vector<1x128xf32> to vector<1x128xf32>
    %114 = vector.broadcast %113 : vector<1x128xf32> to vector<16x128xf32>
    %115 = vector.shape_cast %92 : vector<1x128xf32> to vector<1x128xf32>
    %116 = vector.broadcast %115 : vector<1x128xf32> to vector<16x128xf32>
    %117 = arith.select %112, %114, %116 : vector<16x128xi1>, vector<16x128xf32>
    %118 = vector.shape_cast %2 : vector<16x1xi1> to vector<16x1xi1>
    %119 = vector.broadcast %118 : vector<16x1xi1> to vector<16x128xi1>
    %120 = vector.shape_cast %101 : vector<1x128xf32> to vector<1x128xf32>
    %121 = vector.broadcast %120 : vector<1x128xf32> to vector<16x128xf32>
    %122 = vector.shape_cast %110 : vector<1x128xf32> to vector<1x128xf32>
    %123 = vector.broadcast %122 : vector<1x128xf32> to vector<16x128xf32>
    %124 = arith.select %119, %121, %123 : vector<16x128xi1>, vector<16x128xf32>
    %125 = arith.subf %80, %117 : vector<16x128xf32>
    %cst_48 = arith.constant 9.99999974E-6 : f32
    %126 = vector.broadcast %cst_48 : f32 to vector<16x128xf32>
    %127 = arith.addf %124, %126 : vector<16x128xf32>
    %128 = math.rsqrt %127 : vector<16x128xf32>
    %129 = arith.mulf %125, %128 : vector<16x128xf32>
    %130 = vector.broadcast %81 : vector<1x128xf32> to vector<16x128xf32>
    %131 = arith.mulf %129, %130 : vector<16x128xf32>
    %132 = vector.broadcast %82 : vector<1x128xf32> to vector<16x128xf32>
    %133 = arith.addf %131, %132 : vector<16x128xf32>
    %cst_49 = arith.constant 0.000000e+00 : f32
    %134 = vector.broadcast %cst_49 : f32 to vector<16x128xf32>
    %135 = arith.maximumf %133, %134 : vector<16x128xf32>
    %c0_50 = arith.constant 0 : index
    %c0_51 = arith.constant 0 : index
    %136 = vector.load %arg9[%c0_50, %c0_51] : memref<128x128xf32, #tpu.memory_space<vmem>>, vector<128x128xf32>
    %cst_52 = arith.constant dense<0.000000e+00> : vector<16x128xf32>
    %137 = tpu.matmul %135, %136, %cst_52 {dimension_numbers = #tpu.dot_dimension_numbers<[1], [0], [0], [1], [0, 0, 1, 1], [], []>} : vector<16x128xf32>, vector<128x128xf32>, vector<16x128xf32> -> vector<16x128xf32>
    %c0_53 = arith.constant 0 : index
    %c0_54 = arith.constant 0 : index
    %138 = vector.load %arg10[%c0_53, %c0_54] : memref<1x128xf32, #tpu.memory_space<vmem>>, vector<1x128xf32>
    %139 = vector.broadcast %138 : vector<1x128xf32> to vector<16x128xf32>
    %140 = arith.addf %137, %139 : vector<16x128xf32>
    %141 = vector.extract_strided_slice %140 {offsets = [0, 0], sizes = [8, 128], strides = [1, 1]} : vector<16x128xf32> to vector<8x128xf32>
    %142 = vector.extract_strided_slice %75 {offsets = [8, 0], sizes = [8, 128], strides = [1, 1]} : vector<16x128xf32> to vector<8x128xf32>
    %143 = arith.mulf %141, %141 : vector<8x128xf32>
    %cst_55 = arith.constant dense<0.000000e+00> : vector<8xf32>
    %144 = vector.multi_reduction <add>, %143, %cst_55 [1] : vector<8x128xf32> to vector<8xf32>
    %145 = vector.shape_cast %144 : vector<8xf32> to vector<8x1xf32>
    %cst_56 = arith.constant 1.000000e-24 : f32
    %146 = vector.broadcast %cst_56 : f32 to vector<8x1xf32>
    %147 = arith.maximumf %145, %146 : vector<8x1xf32>
    %148 = math.rsqrt %147 : vector<8x1xf32>
    %149 = vector.broadcast %148 : vector<8x1xf32> to vector<8x128xf32>
    %150 = arith.mulf %141, %149 : vector<8x128xf32>
    %151 = arith.mulf %142, %142 : vector<8x128xf32>
    %cst_57 = arith.constant dense<0.000000e+00> : vector<8xf32>
    %152 = vector.multi_reduction <add>, %151, %cst_57 [1] : vector<8x128xf32> to vector<8xf32>
    %153 = vector.shape_cast %152 : vector<8xf32> to vector<8x1xf32>
    %cst_58 = arith.constant 1.000000e-24 : f32
    %154 = vector.broadcast %cst_58 : f32 to vector<8x1xf32>
    %155 = arith.maximumf %153, %154 : vector<8x1xf32>
    %156 = math.rsqrt %155 : vector<8x1xf32>
    %157 = vector.broadcast %156 : vector<8x1xf32> to vector<8x128xf32>
    %158 = arith.mulf %142, %157 : vector<8x128xf32>
    %159 = arith.mulf %150, %158 : vector<8x128xf32>
    %cst_59 = arith.constant dense<0.000000e+00> : vector<8xf32>
    %160 = vector.multi_reduction <add>, %159, %cst_59 [1] : vector<8x128xf32> to vector<8xf32>
    %161 = vector.shape_cast %160 : vector<8xf32> to vector<8x1xf32>
    %162 = vector.shape_cast %161 : vector<8x1xf32> to vector<1x8x1xf32>
    %cst_60 = arith.constant dense<0.000000e+00> : vector<1xf32>
    %163 = vector.multi_reduction <add>, %162, %cst_60 [1, 2] : vector<1x8x1xf32> to vector<1xf32>
    %164 = vector.shape_cast %163 : vector<1xf32> to vector<1x1x1xf32>
    %165 = vector.extract %164[0, 0, 0] : f32 from vector<1x1x1xf32>
    %cst_61 = arith.constant 8.000000e+00 : f32
    %166 = arith.divf %165, %cst_61 : f32
    %cst_62 = arith.constant 2.000000e+00 : f32
    %167 = arith.mulf %cst_62, %166 : f32
    %cst_63 = arith.constant 2.000000e+00 : f32
    %168 = arith.subf %cst_63, %167 : f32
    %cst_64 = arith.constant 5.000000e-01 : f32
    %169 = arith.mulf %cst_64, %168 : f32
    %170 = vector.extract_strided_slice %140 {offsets = [8, 0], sizes = [8, 128], strides = [1, 1]} : vector<16x128xf32> to vector<8x128xf32>
    %171 = vector.extract_strided_slice %75 {offsets = [0, 0], sizes = [8, 128], strides = [1, 1]} : vector<16x128xf32> to vector<8x128xf32>
    %172 = arith.mulf %170, %170 : vector<8x128xf32>
    %cst_65 = arith.constant dense<0.000000e+00> : vector<8xf32>
    %173 = vector.multi_reduction <add>, %172, %cst_65 [1] : vector<8x128xf32> to vector<8xf32>
    %174 = vector.shape_cast %173 : vector<8xf32> to vector<8x1xf32>
    %cst_66 = arith.constant 1.000000e-24 : f32
    %175 = vector.broadcast %cst_66 : f32 to vector<8x1xf32>
    %176 = arith.maximumf %174, %175 : vector<8x1xf32>
    %177 = math.rsqrt %176 : vector<8x1xf32>
    %178 = vector.broadcast %177 : vector<8x1xf32> to vector<8x128xf32>
    %179 = arith.mulf %170, %178 : vector<8x128xf32>
    %180 = arith.mulf %171, %171 : vector<8x128xf32>
    %cst_67 = arith.constant dense<0.000000e+00> : vector<8xf32>
    %181 = vector.multi_reduction <add>, %180, %cst_67 [1] : vector<8x128xf32> to vector<8xf32>
    %182 = vector.shape_cast %181 : vector<8xf32> to vector<8x1xf32>
    %cst_68 = arith.constant 1.000000e-24 : f32
    %183 = vector.broadcast %cst_68 : f32 to vector<8x1xf32>
    %184 = arith.maximumf %182, %183 : vector<8x1xf32>
    %185 = math.rsqrt %184 : vector<8x1xf32>
    %186 = vector.broadcast %185 : vector<8x1xf32> to vector<8x128xf32>
    %187 = arith.mulf %171, %186 : vector<8x128xf32>
    %188 = arith.mulf %179, %187 : vector<8x128xf32>
    %cst_69 = arith.constant dense<0.000000e+00> : vector<8xf32>
    %189 = vector.multi_reduction <add>, %188, %cst_69 [1] : vector<8x128xf32> to vector<8xf32>
    %190 = vector.shape_cast %189 : vector<8xf32> to vector<8x1xf32>
    %191 = vector.shape_cast %190 : vector<8x1xf32> to vector<1x8x1xf32>
    %cst_70 = arith.constant dense<0.000000e+00> : vector<1xf32>
    %192 = vector.multi_reduction <add>, %191, %cst_70 [1, 2] : vector<1x8x1xf32> to vector<1xf32>
    %193 = vector.shape_cast %192 : vector<1xf32> to vector<1x1x1xf32>
    %194 = vector.extract %193[0, 0, 0] : f32 from vector<1x1x1xf32>
    %cst_71 = arith.constant 8.000000e+00 : f32
    %195 = arith.divf %194, %cst_71 : f32
    %cst_72 = arith.constant 2.000000e+00 : f32
    %196 = arith.mulf %cst_72, %195 : f32
    %cst_73 = arith.constant 2.000000e+00 : f32
    %197 = arith.subf %cst_73, %196 : f32
    %cst_74 = arith.constant 5.000000e-01 : f32
    %198 = arith.mulf %cst_74, %197 : f32
    %199 = arith.addf %169, %198 : f32
    %c0_75 = arith.constant 0 : index
    %c0_76 = arith.constant 0 : index
    %200 = memref.load %arg11[%c0_75, %c0_76] : memref<1x1xf32, #tpu.memory_space<smem>>
    memref.store %199, %arg11[%c0_75, %c0_76] : memref<1x1xf32, #tpu.memory_space<smem>>
    return
  }
}

</mosaic_0001>

<llo_original>
// kernel: byol_forward.1
$region0: #{byol_forward.1}
  #allocation0 [shape = 'u32[]', space=smem, size = 0x4, offset = 0x4, fixed_abs, tag = 'smem constant byte address 0x4 - core index']
  #allocation1 [shape = 'u32[144,128]{1,0:T(1,128)}', space=vmem, size = 0x12000, scoped, tag = 'internal scratch']
  %s0 = inlined_call_operand.vmem [shape: f32[16,1024], index: 0, kind: input, shape index: {}]
  %s1 = inlined_call_operand.vmem [shape: f32[1024,256], index: 1, kind: input, shape index: {}]
  %s2 = inlined_call_operand.vmem [shape: f32[1,256], index: 2, kind: input, shape index: {}]
  %s3 = inlined_call_operand.vmem [shape: f32[256,256], index: 3, kind: input, shape index: {}]
  %s4 = inlined_call_operand.vmem [shape: f32[3,256], index: 4, kind: input, shape index: {}]
  %s5 = inlined_call_operand.vmem [shape: f32[256,256], index: 5, kind: input, shape index: {}]
  %s6 = inlined_call_operand.vmem [shape: f32[1,256], index: 6, kind: input, shape index: {}]
  %s7 = inlined_call_operand.vmem [shape: f32[128,128], index: 7, kind: input, shape index: {}]
  %s8 = inlined_call_operand.vmem [shape: f32[3,128], index: 8, kind: input, shape index: {}]
  %s9 = inlined_call_operand.vmem [shape: f32[128,128], index: 9, kind: input, shape index: {}]
  %s10 = inlined_call_operand.vmem [shape: f32[1,128], index: 10, kind: input, shape index: {}]
  %s11 = inlined_call_operand.hbm [shape: f32[1,1], index: 11, kind: output, shape index: {}]
  %s12 = sld [smem:[#allocation0]]
  $region54: #{byol_forward.1} parent=0
    _
  %s14 = ssub.s32 1, %s12
  %s15 = scalar_select 0, %s14, %s12
  $region1: #{byol_forward.1} parent=0
    #allocation2 [shape = 'u8[512]{0}', space=smem, size = 0x200, scoped, tag = 'output window, operand 0, single buffered']
    #allocation3 [shape = 's32[1]{0}', space=sflag, size = 0x4, scoped, tag = 'scoped memory for byol_forward.1']
    %16 = vsyncpa [#allocation3], 0
    // Predicated region
    $region2: #{byol_forward.1} parent=1 // pred_check
      _
    $region3: #{byol_forward.1} parent=1 // pred_check_branch
      %18 = sbr.rel (0) target = $region5
    $region4: #{byol_forward.1} parent=1 // pred_region
      _
    $region5: #{byol_forward.1} parent=1 // pred_fallthru
      _
    // Predicated region
    $region6: #{byol_forward.1} parent=1 // pred_check
      _
    $region7: #{byol_forward.1} parent=1 // pred_check_branch
      %20 = sbr.rel (0) target = $region9
    $region8: #{byol_forward.1} parent=1 // pred_region
      _
    $region9: #{byol_forward.1} parent=1 // pred_fallthru
      _
    // Predicated region
    $region10: #{byol_forward.1} parent=1 // pred_check
      _
    $region11: #{byol_forward.1} parent=1 // pred_check_branch
      %22 = sbr.rel (0) target = $region13
    $region12: #{byol_forward.1} parent=1 // pred_region
      _
    $region13: #{byol_forward.1} parent=1 // pred_fallthru
      _
    // Predicated region
    $region14: #{byol_forward.1} parent=1 // pred_check
      _
    $region15: #{byol_forward.1} parent=1 // pred_check_branch
      %24 = sbr.rel (0) target = $region17
    $region16: #{byol_forward.1} parent=1 // pred_region
      _
    $region17: #{byol_forward.1} parent=1 // pred_fallthru
      _
    // Predicated region
    $region18: #{byol_forward.1} parent=1 // pred_check
      _
    $region19: #{byol_forward.1} parent=1 // pred_check_branch
      %26 = sbr.rel (0) target = $region21
    $region20: #{byol_forward.1} parent=1 // pred_region
      _
    $region21: #{byol_forward.1} parent=1 // pred_fallthru
      _
    // Predicated region
    $region22: #{byol_forward.1} parent=1 // pred_check
      _
    $region23: #{byol_forward.1} parent=1 // pred_check_branch
      %28 = sbr.rel (0) target = $region25
    $region24: #{byol_forward.1} parent=1 // pred_region
      _
    $region25: #{byol_forward.1} parent=1 // pred_fallthru
      _
    // Predicated region
    $region26: #{byol_forward.1} parent=1 // pred_check
      _
    $region27: #{byol_forward.1} parent=1 // pred_check_branch
      %30 = sbr.rel (0) target = $region29
    $region28: #{byol_forward.1} parent=1 // pred_region
      _
    $region29: #{byol_forward.1} parent=1 // pred_fallthru
      _
    // Predicated region
    $region30: #{byol_forward.1} parent=1 // pred_check
      _
    $region31: #{byol_forward.1} parent=1 // pred_check_branch
      %32 = sbr.rel (0) target = $region33
    $region32: #{byol_forward.1} parent=1 // pred_region
      _
    $region33: #{byol_forward.1} parent=1 // pred_fallthru
      _
    // Predicated region
    $region34: #{byol_forward.1} parent=1 // pred_check
      _
    $region35: #{byol_forward.1} parent=1 // pred_check_branch
      %34 = sbr.rel (0) target = $region37
    $region36: #{byol_forward.1} parent=1 // pred_region
      _
    $region37: #{byol_forward.1} parent=1 // pred_fallthru
      _
    // Predicated region
    $region38: #{byol_forward.1} parent=1 // pred_check
      _
    $region39: #{byol_forward.1} parent=1 // pred_check_branch
      %36 = sbr.rel (0) target = $region41
    $region40: #{byol_forward.1} parent=1 // pred_region
      _
    $region41: #{byol_forward.1} parent=1 // pred_fallthru
      _
    // Predicated region
    $region42: #{byol_forward.1} parent=1 // pred_check
      _
    $region43: #{byol_forward.1} parent=1 // pred_check_branch
      %38 = sbr.rel (0) target = $region45
    $region44: #{byol_forward.1} parent=1 // pred_region
      _
    $region45: #{byol_forward.1} parent=1 // pred_fallthru
      _
    %v39 = vlaneseq
    %v40 = vshrl.u32 %v39, 7
    %v41 = vadd.s32 %v40, 8
    %vm42 = vcmp.lt.s32.totalorder %v40, 8
    %vm43 = vcmp.lt.s32.totalorder %v41, 8
    %v44 = vld [vmem:[%s0] sm:$0xff]
    %v45 = vld [vmem:[%s0 + $0x8] sm:$0xff]
    %v46 = vld [vmem:[%s0 + $0x10] sm:$0xff]
    %v47 = vld [vmem:[%s0 + $0x18] sm:$0xff]
    %v48 = vld [vmem:[%s0 + $0x20] sm:$0xff]
    %v49 = vld [vmem:[%s0 + $0x28] sm:$0xff]
    %v50 = vld [vmem:[%s0 + $0x30] sm:$0xff]
    %v51 = vld [vmem:[%s0 + $0x38] sm:$0xff]
    %v52 = vld [vmem:[%s0 + $0x40] sm:$0xff]
    %v53 = vld [vmem:[%s0 + $0x48] sm:$0xff]
    %v54 = vld [vmem:[%s0 + $0x50] sm:$0xff]
    %v55 = vld [vmem:[%s0 + $0x58] sm:$0xff]
    %v56 = vld [vmem:[%s0 + $0x60] sm:$0xff]
    %v57 = vld [vmem:[%s0 + $0x68] sm:$0xff]
    %v58 = vld [vmem:[%s0 + $0x70] sm:$0xff]
    %v59 = vld [vmem:[%s0 + $0x78] sm:$0xff]
    %v60 = vld [vmem:[%s1] sm:$0xff]
    %v61 = vld [vmem:[%s1 + $0x8] sm:$0xff]
    %v62 = vld [vmem:[%s1 + $0x10] sm:$0xff]
    %v63 = vld [vmem:[%s1 + $0x18] sm:$0xff]
    %v64 = vld [vmem:[%s1 + $0x20] sm:$0xff]
    %v65 = vld [vmem:[%s1 + $0x28] sm:$0xff]
    %v66 = vld [vmem:[%s1 + $0x30] sm:$0xff]
    %v67 = vld [vmem:[%s1 + $0x38] sm:$0xff]
    %v68 = vld [vmem:[%s1 + $0x40] sm:$0xff]
    %v69 = vld [vmem:[%s1 + $0x48] sm:$0xff]
    %v70 = vld [vmem:[%s1 + $0x50] sm:$0xff]
    %v71 = vld [vmem:[%s1 + $0x58] sm:$0xff]
    %v72 = vld [vmem:[%s1 + $0x60] sm:$0xff]
    %v73 = vld [vmem:[%s1 + $0x68] sm:$0xff]
    %v74 = vld [vmem:[%s1 + $0x70] sm:$0xff]
    %v75 = vld [vmem:[%s1 + $0x78] sm:$0xff]
    %v76 = vld [vmem:[%s1 + $0x80] sm:$0xff]
    %v77 = vld [vmem:[%s1 + $0x88] sm:$0xff]
    %v78 = vld [vmem:[%s1 + $0x90] sm:$0xff]
    %v79 = vld [vmem:[%s1 + $0x98] sm:$0xff]
    %v80 = vld [vmem:[%s1 + $0xa0] sm:$0xff]
    %v81 = vld [vmem:[%s1 + $0xa8] sm:$0xff]
    %v82 = vld [vmem:[%s1 + $0xb0] sm:$0xff]
    %v83 = vld [vmem:[%s1 + $0xb8] sm:$0xff]
    %v84 = vld [vmem:[%s1 + $0xc0] sm:$0xff]
    %v85 = vld [vmem:[%s1 + $0xc8] sm:$0xff]
    %v86 = vld [vmem:[%s1 + $0xd0] sm:$0xff]
    %v87 = vld [vmem:[%s1 + $0xd8] sm:$0xff]
    %v88 = vld [vmem:[%s1 + $0xe0] sm:$0xff]
    %v89 = vld [vmem:[%s1 + $0xe8] sm:$0xff]
    %v90 = vld [vmem:[%s1 + $0xf0] sm:$0xff]
    %v91 = vld [vmem:[%s1 + $0xf8] sm:$0xff]
    %v92 = vld [vmem:[%s1 + $0x100] sm:$0xff]
    %v93 = vld [vmem:[%s1 + $0x108] sm:$0xff]
    %v94 = vld [vmem:[%s1 + $0x110] sm:$0xff]
    %v95 = vld [vmem:[%s1 + $0x118] sm:$0xff]
    %v96 = vld [vmem:[%s1 + $0x120] sm:$0xff]
    %v97 = vld [vmem:[%s1 + $0x128] sm:$0xff]
    %v98 = vld [vmem:[%s1 + $0x130] sm:$0xff]
    %v99 = vld [vmem:[%s1 + $0x138] sm:$0xff]
    %v100 = vld [vmem:[%s1 + $0x140] sm:$0xff]
    %v101 = vld [vmem:[%s1 + $0x148] sm:$0xff]
    %v102 = vld [vmem:[%s1 + $0x150] sm:$0xff]
    %v103 = vld [vmem:[%s1 + $0x158] sm:$0xff]
    %v104 = vld [vmem:[%s1 + $0x160] sm:$0xff]
    %v105 = vld [vmem:[%s1 + $0x168] sm:$0xff]
    %v106 = vld [vmem:[%s1 + $0x170] sm:$0xff]
    %v107 = vld [vmem:[%s1 + $0x178] sm:$0xff]
    %v108 = vld [vmem:[%s1 + $0x180] sm:$0xff]
    %v109 = vld [vmem:[%s1 + $0x188] sm:$0xff]
    %v110 = vld [vmem:[%s1 + $0x190] sm:$0xff]
    %v111 = vld [vmem:[%s1 + $0x198] sm:$0xff]
    %v112 = vld [vmem:[%s1 + $0x1a0] sm:$0xff]
    %v113 = vld [vmem:[%s1 + $0x1a8] sm:$0xff]
    %v114 = vld [vmem:[%s1 + $0x1b0] sm:$0xff]
    %v115 = vld [vmem:[%s1 + $0x1b8] sm:$0xff]
    %v116 = vld [vmem:[%s1 + $0x1c0] sm:$0xff]
    %v117 = vld [vmem:[%s1 + $0x1c8] sm:$0xff]
    %v118 = vld [vmem:[%s1 + $0x1d0] sm:$0xff]
    %v119 = vld [vmem:[%s1 + $0x1d8] sm:$0xff]
    %v120 = vld [vmem:[%s1 + $0x1e0] sm:$0xff]
    %v121 = vld [vmem:[%s1 + $0x1e8] sm:$0xff]
    %v122 = vld [vmem:[%s1 + $0x1f0] sm:$0xff]
    %v123 = vld [vmem:[%s1 + $0x1f8] sm:$0xff]
    %v124 = vld [vmem:[%s1 + $0x200] sm:$0xff]
    %v125 = vld [vmem:[%s1 + $0x208] sm:$0xff]
    %v126 = vld [vmem:[%s1 + $0x210] sm:$0xff]
    %v127 = vld [vmem:[%s1 + $0x218] sm:$0xff]
    %v128 = vld [vmem:[%s1 + $0x220] sm:$0xff]
    %v129 = vld [vmem:[%s1 + $0x228] sm:$0xff]
    %v130 = vld [vmem:[%s1 + $0x230] sm:$0xff]
    %v131 = vld [vmem:[%s1 + $0x238] sm:$0xff]
    %v132 = vld [vmem:[%s1 + $0x240] sm:$0xff]
    %v133 = vld [vmem:[%s1 + $0x248] sm:$0xff]
    %v134 = vld [vmem:[%s1 + $0x250] sm:$0xff]
    %v135 = vld [vmem:[%s1 + $0x258] sm:$0xff]
    %v136 = vld [vmem:[%s1 + $0x260] sm:$0xff]
    %v137 = vld [vmem:[%s1 + $0x268] sm:$0xff]
    %v138 = vld [vmem:[%s1 + $0x270] sm:$0xff]
    %v139 = vld [vmem:[%s1 + $0x278] sm:$0xff]
    %v140 = vld [vmem:[%s1 + $0x280] sm:$0xff]
    %v141 = vld [vmem:[%s1 + $0x288] sm:$0xff]
    %v142 = vld [vmem:[%s1 + $0x290] sm:$0xff]
    %v143 = vld [vmem:[%s1 + $0x298] sm:$0xff]
    %v144 = vld [vmem:[%s1 + $0x2a0] sm:$0xff]
    %v145 = vld [vmem:[%s1 + $0x2a8] sm:$0xff]
    %v146 = vld [vmem:[%s1 + $0x2b0] sm:$0xff]
    %v147 = vld [vmem:[%s1 + $0x2b8] sm:$0xff]
    %v148 = vld [vmem:[%s1 + $0x2c0] sm:$0xff]
    %v149 = vld [vmem:[%s1 + $0x2c8] sm:$0xff]
    %v150 = vld [vmem:[%s1 + $0x2d0] sm:$0xff]
    %v151 = vld [vmem:[%s1 + $0x2d8] sm:$0xff]
    %v152 = vld [vmem:[%s1 + $0x2e0] sm:$0xff]
    %v153 = vld [vmem:[%s1 + $0x2e8] sm:$0xff]
    %v154 = vld [vmem:[%s1 + $0x2f0] sm:$0xff]
    %v155 = vld [vmem:[%s1 + $0x2f8] sm:$0xff]
    %v156 = vld [vmem:[%s1 + $0x300] sm:$0xff]
    %v157 = vld [vmem:[%s1 + $0x308] sm:$0xff]
    %v158 = vld [vmem:[%s1 + $0x310] sm:$0xff]
    %v159 = vld [vmem:[%s1 + $0x318] sm:$0xff]
    %v160 = vld [vmem:[%s1 + $0x320] sm:$0xff]
    %v161 = vld [vmem:[%s1 + $0x328] sm:$0xff]
    %v162 = vld [vmem:[%s1 + $0x330] sm:$0xff]
    %v163 = vld [vmem:[%s1 + $0x338] sm:$0xff]
    %v164 = vld [vmem:[%s1 + $0x340] sm:$0xff]
    %v165 = vld [vmem:[%s1 + $0x348] sm:$0xff]
    %v166 = vld [vmem:[%s1 + $0x350] sm:$0xff]
    %v167 = vld [vmem:[%s1 + $0x358] sm:$0xff]
    %v168 = vld [vmem:[%s1 + $0x360] sm:$0xff]
    %v169 = vld [vmem:[%s1 + $0x368] sm:$0xff]
    %v170 = vld [vmem:[%s1 + $0x370] sm:$0xff]
    %v171 = vld [vmem:[%s1 + $0x378] sm:$0xff]
    %v172 = vld [vmem:[%s1 + $0x380] sm:$0xff]
    %v173 = vld [vmem:[%s1 + $0x388] sm:$0xff]
    %v174 = vld [vmem:[%s1 + $0x390] sm:$0xff]
    %v175 = vld [vmem:[%s1 + $0x398] sm:$0xff]
    %v176 = vld [vmem:[%s1 + $0x3a0] sm:$0xff]
    %v177 = vld [vmem:[%s1 + $0x3a8] sm:$0xff]
    %v178 = vld [vmem:[%s1 + $0x3b0] sm:$0xff]
    %v179 = vld [vmem:[%s1 + $0x3b8] sm:$0xff]
    %v180 = vld [vmem:[%s1 + $0x3c0] sm:$0xff]
    %v181 = vld [vmem:[%s1 + $0x3c8] sm:$0xff]
    %v182 = vld [vmem:[%s1 + $0x3d0] sm:$0xff]
    %v183 = vld [vmem:[%s1 + $0x3d8] sm:$0xff]
    %v184 = vld [vmem:[%s1 + $0x3e0] sm:$0xff]
    %v185 = vld [vmem:[%s1 + $0x3e8] sm:$0xff]
    %v186 = vld [vmem:[%s1 + $0x3f0] sm:$0xff]
    %v187 = vld [vmem:[%s1 + $0x3f8] sm:$0xff]
    %v188 = vld [vmem:[%s1 + $0x400] sm:$0xff]
    %v189 = vld [vmem:[%s1 + $0x408] sm:$0xff]
    %v190 = vld [vmem:[%s1 + $0x410] sm:$0xff]
    %v191 = vld [vmem:[%s1 + $0x418] sm:$0xff]
    %v192 = vld [vmem:[%s1 + $0x420] sm:$0xff]
    %v193 = vld [vmem:[%s1 + $0x428] sm:$0xff]
    %v194 = vld [vmem:[%s1 + $0x430] sm:$0xff]
    %v195 = vld [vmem:[%s1 + $0x438] sm:$0xff]
    %v196 = vld [vmem:[%s1 + $0x440] sm:$0xff]
    %v197 = vld [vmem:[%s1 + $0x448] sm:$0xff]
    %v198 = vld [vmem:[%s1 + $0x450] sm:$0xff]
    %v199 = vld [vmem:[%s1 + $0x458] sm:$0xff]
    %v200 = vld [vmem:[%s1 + $0x460] sm:$0xff]
    %v201 = vld [vmem:[%s1 + $0x468] sm:$0xff]
    %v202 = vld [vmem:[%s1 + $0x470] sm:$0xff]
    %v203 = vld [vmem:[%s1 + $0x478] sm:$0xff]
    %v204 = vld [vmem:[%s1 + $0x480] sm:$0xff]
    %v205 = vld [vmem:[%s1 + $0x488] sm:$0xff]
    %v206 = vld [vmem:[%s1 + $0x490] sm:$0xff]
    %v207 = vld [vmem:[%s1 + $0x498] sm:$0xff]
    %v208 = vld [vmem:[%s1 + $0x4a0] sm:$0xff]
    %v209 = vld [vmem:[%s1 + $0x4a8] sm:$0xff]
    %v210 = vld [vmem:[%s1 + $0x4b0] sm:$0xff]
    %v211 = vld [vmem:[%s1 + $0x4b8] sm:$0xff]
    %v212 = vld [vmem:[%s1 + $0x4c0] sm:$0xff]
    %v213 = vld [vmem:[%s1 + $0x4c8] sm:$0xff]
    %v214 = vld [vmem:[%s1 + $0x4d0] sm:$0xff]
    %v215 = vld [vmem:[%s1 + $0x4d8] sm:$0xff]
    %v216 = vld [vmem:[%s1 + $0x4e0] sm:$0xff]
    %v217 = vld [vmem:[%s1 + $0x4e8] sm:$0xff]
    %v218 = vld [vmem:[%s1 + $0x4f0] sm:$0xff]
    %v219 = vld [vmem:[%s1 + $0x4f8] sm:$0xff]
    %v220 = vld [vmem:[%s1 + $0x500] sm:$0xff]
    %v221 = vld [vmem:[%s1 + $0x508] sm:$0xff]
    %v222 = vld [vmem:[%s1 + $0x510] sm:$0xff]
    %v223 = vld [vmem:[%s1 + $0x518] sm:$0xff]
    %v224 = vld [vmem:[%s1 + $0x520] sm:$0xff]
    %v225 = vld [vmem:[%s1 + $0x528] sm:$0xff]
    %v226 = vld [vmem:[%s1 + $0x530] sm:$0xff]
    %v227 = vld [vmem:[%s1 + $0x538] sm:$0xff]
    %v228 = vld [vmem:[%s1 + $0x540] sm:$0xff]
    %v229 = vld [vmem:[%s1 + $0x548] sm:$0xff]
    %v230 = vld [vmem:[%s1 + $0x550] sm:$0xff]
    %v231 = vld [vmem:[%s1 + $0x558] sm:$0xff]
    %v232 = vld [vmem:[%s1 + $0x560] sm:$0xff]
    %v233 = vld [vmem:[%s1 + $0x568] sm:$0xff]
    %v234 = vld [vmem:[%s1 + $0x570] sm:$0xff]
    %v235 = vld [vmem:[%s1 + $0x578] sm:$0xff]
    %v236 = vld [vmem:[%s1 + $0x580] sm:$0xff]
    %v237 = vld [vmem:[%s1 + $0x588] sm:$0xff]
    %v238 = vld [vmem:[%s1 + $0x590] sm:$0xff]
    %v239 = vld [vmem:[%s1 + $0x598] sm:$0xff]
    %v240 = vld [vmem:[%s1 + $0x5a0] sm:$0xff]
    %v241 = vld [vmem:[%s1 + $0x5a8] sm:$0xff]
    %v242 = vld [vmem:[%s1 + $0x5b0] sm:$0xff]
    %v243 = vld [vmem:[%s1 + $0x5b8] sm:$0xff]
    %v244 = vld [vmem:[%s1 + $0x5c0] sm:$0xff]
    %v245 = vld [vmem:[%s1 + $0x5c8] sm:$0xff]
    %v246 = vld [vmem:[%s1 + $0x5d0] sm:$0xff]
    %v247 = vld [vmem:[%s1 + $0x5d8] sm:$0xff]
    %v248 = vld [vmem:[%s1 + $0x5e0] sm:$0xff]
    %v249 = vld [vmem:[%s1 + $0x5e8] sm:$0xff]
    %v250 = vld [vmem:[%s1 + $0x5f0] sm:$0xff]
    %v251 = vld [vmem:[%s1 + $0x5f8] sm:$0xff]
    %v252 = vld [vmem:[%s1 + $0x600] sm:$0xff]
    %v253 = vld [vmem:[%s1 + $0x608] sm:$0xff]
    %v254 = vld [vmem:[%s1 + $0x610] sm:$0xff]
    %v255 = vld [vmem:[%s1 + $0x618] sm:$0xff]
    %v256 = vld [vmem:[%s1 + $0x620] sm:$0xff]
    %v257 = vld [vmem:[%s1 + $0x628] sm:$0xff]
    %v258 = vld [vmem:[%s1 + $0x630] sm:$0xff]
    %v259 = vld [vmem:[%s1 + $0x638] sm:$0xff]
    %v260 = vld [vmem:[%s1 + $0x640] sm:$0xff]
    %v261 = vld [vmem:[%s1 + $0x648] sm:$0xff]
    %v262 = vld [vmem:[%s1 + $0x650] sm:$0xff]
    %v263 = vld [vmem:[%s1 + $0x658] sm:$0xff]
    %v264 = vld [vmem:[%s1 + $0x660] sm:$0xff]
    %v265 = vld [vmem:[%s1 + $0x668] sm:$0xff]
    %v266 = vld [vmem:[%s1 + $0x670] sm:$0xff]
    %v267 = vld [vmem:[%s1 + $0x678] sm:$0xff]
    %v268 = vld [vmem:[%s1 + $0x680] sm:$0xff]
    %v269 = vld [vmem:[%s1 + $0x688] sm:$0xff]
    %v270 = vld [vmem:[%s1 + $0x690] sm:$0xff]
    %v271 = vld [vmem:[%s1 + $0x698] sm:$0xff]
    %v272 = vld [vmem:[%s1 + $0x6a0] sm:$0xff]
    %v273 = vld [vmem:[%s1 + $0x6a8] sm:$0xff]
    %v274 = vld [vmem:[%s1 + $0x6b0] sm:$0xff]
    %v275 = vld [vmem:[%s1 + $0x6b8] sm:$0xff]
    %v276 = vld [vmem:[%s1 + $0x6c0] sm:$0xff]
    %v277 = vld [vmem:[%s1 + $0x6c8] sm:$0xff]
    %v278 = vld [vmem:[%s1 + $0x6d0] sm:$0xff]
    %v279 = vld [vmem:[%s1 + $0x6d8] sm:$0xff]
    %v280 = vld [vmem:[%s1 + $0x6e0] sm:$0xff]
    %v281 = vld [vmem:[%s1 + $0x6e8] sm:$0xff]
    %v282 = vld [vmem:[%s1 + $0x6f0] sm:$0xff]
    %v283 = vld [vmem:[%s1 + $0x6f8] sm:$0xff]
    %v284 = vld [vmem:[%s1 + $0x700] sm:$0xff]
    %v285 = vld [vmem:[%s1 + $0x708] sm:$0xff]
    %v286 = vld [vmem:[%s1 + $0x710] sm:$0xff]
    %v287 = vld [vmem:[%s1 + $0x718] sm:$0xff]
    %v288 = vld [vmem:[%s1 + $0x720] sm:$0xff]
    %v289 = vld [vmem:[%s1 + $0x728] sm:$0xff]
    %v290 = vld [vmem:[%s1 + $0x730] sm:$0xff]
    %v291 = vld [vmem:[%s1 + $0x738] sm:$0xff]
    %v292 = vld [vmem:[%s1 + $0x740] sm:$0xff]
    %v293 = vld [vmem:[%s1 + $0x748] sm:$0xff]
    %v294 = vld [vmem:[%s1 + $0x750] sm:$0xff]
    %v295 = vld [vmem:[%s1 + $0x758] sm:$0xff]
    %v296 = vld [vmem:[%s1 + $0x760] sm:$0xff]
    %v297 = vld [vmem:[%s1 + $0x768] sm:$0xff]
    %v298 = vld [vmem:[%s1 + $0x770] sm:$0xff]
    %v299 = vld [vmem:[%s1 + $0x778] sm:$0xff]
    %v300 = vld [vmem:[%s1 + $0x780] sm:$0xff]
    %v301 = vld [vmem:[%s1 + $0x788] sm:$0xff]
    %v302 = vld [vmem:[%s1 + $0x790] sm:$0xff]
    %v303 = vld [vmem:[%s1 + $0x798] sm:$0xff]
    %v304 = vld [vmem:[%s1 + $0x7a0] sm:$0xff]
    %v305 = vld [vmem:[%s1 + $0x7a8] sm:$0xff]
    %v306 = vld [vmem:[%s1 + $0x7b0] sm:$0xff]
    %v307 = vld [vmem:[%s1 + $0x7b8] sm:$0xff]
    %v308 = vld [vmem:[%s1 + $0x7c0] sm:$0xff]
    %v309 = vld [vmem:[%s1 + $0x7c8] sm:$0xff]
    %v310 = vld [vmem:[%s1 + $0x7d0] sm:$0xff]
    %v311 = vld [vmem:[%s1 + $0x7d8] sm:$0xff]
    %v312 = vld [vmem:[%s1 + $0x7e0] sm:$0xff]
    %v313 = vld [vmem:[%s1 + $0x7e8] sm:$0xff]
    %v314 = vld [vmem:[%s1 + $0x7f0] sm:$0xff]
    %v315 = vld [vmem:[%s1 + $0x7f8] sm:$0xff]
    %v316 = vld [vmem:[%s2] sm:$0x3]
    %v318 = vlaneseq
    %v319 = vshrl.u32 %v318, 7
    %v320 = vsub.s32 0, %v319
    %v321 = vrot.slane %v316, %v320
    %v322 = vlaneseq
    %v323 = vshrl.u32 %v322, 7
    %v324 = vsub.s32 1, %v323
    %v325 = vrot.slane %v316, %v324
    %328 = vmatprep.subr.mxu0 %v91
    %329 = vmatpush1.msra.mxu0 %v90
    %330 = vmatprep.subr.mxu0 %v89
    %331 = vmatpush1.msra.mxu0 %v88
    %332 = vmatprep.subr.mxu0 %v87
    %333 = vmatpush1.msra.mxu0 %v86
    %334 = vmatprep.subr.mxu0 %v85
    %335 = vmatpush1.msra.mxu0 %v84
    %336 = vmatprep.subr.mxu0 %v83
    %337 = vmatpush1.msra.mxu0 %v82
    %338 = vmatprep.subr.mxu0 %v81
    %339 = vmatpush1.msra.mxu0 %v80
    %340 = vmatprep.subr.mxu0 %v79
    %341 = vmatpush1.msra.mxu0 %v78
    %342 = vmatprep.subr.mxu0 %v77
    %343 = vmatpush1.msra.mxu0 %v76
    %344 = vmatprep.subr.mxu0 %v75
    %345 = vmatpush1.msra.mxu0 %v74
    %346 = vmatprep.subr.mxu0 %v73
    %347 = vmatpush1.msra.mxu0 %v72
    %348 = vmatprep.subr.mxu0 %v71
    %349 = vmatpush1.msra.mxu0 %v70
    %350 = vmatprep.subr.mxu0 %v69
    %351 = vmatpush1.msra.mxu0 %v68
    %352 = vmatprep.subr.mxu0 %v67
    %353 = vmatpush1.msra.mxu0 %v66
    %354 = vmatprep.subr.mxu0 %v65
    %355 = vmatpush1.msra.mxu0 %v64
    %356 = vmatprep.subr.mxu0 %v63
    %357 = vmatpush1.msra.mxu0 %v62
    %358 = vmatprep.subr.mxu0 %v61
    %359 = vmatpush1.msra.mxu0 %v60
    %360 = vmatprep.subr.mxu0 %v123
    %361 = vmatpush2.msra.mxu0 %v122
    %362 = vmatprep.subr.mxu0 %v121
    %363 = vmatpush2.msra.mxu0 %v120
    %364 = vmatprep.subr.mxu0 %v119
    %365 = vmatpush2.msra.mxu0 %v118
    %366 = vmatprep.subr.mxu0 %v117
    %367 = vmatpush2.msra.mxu0 %v116
    %368 = vmatprep.subr.mxu0 %v115
    %369 = vmatpush2.msra.mxu0 %v114
    %370 = vmatprep.subr.mxu0 %v113
    %371 = vmatpush2.msra.mxu0 %v112
    %372 = vmatprep.subr.mxu0 %v111
    %373 = vmatpush2.msra.mxu0 %v110
    %374 = vmatprep.subr.mxu0 %v109
    %375 = vmatpush2.msra.mxu0 %v108
    %376 = vmatprep.subr.mxu0 %v107
    %377 = vmatpush2.msra.mxu0 %v106
    %378 = vmatprep.subr.mxu0 %v105
    %379 = vmatpush2.msra.mxu0 %v104
    %380 = vmatprep.subr.mxu0 %v103
    %381 = vmatpush2.msra.mxu0 %v102
    %382 = vmatprep.subr.mxu0 %v101
    %383 = vmatpush2.msra.mxu0 %v100
    %384 = vmatprep.subr.mxu0 %v99
    %385 = vmatpush2.msra.mxu0 %v98
    %386 = vmatprep.subr.mxu0 %v97
    %387 = vmatpush2.msra.mxu0 %v96
    %388 = vmatprep.subr.mxu0 %v95
    %389 = vmatpush2.msra.mxu0 %v94
    %390 = vmatprep.subr.mxu0 %v93
    %391 = vmatpush2.msra.mxu0 %v92
    %392 = vmatprep.mubr.f32.mxu0 %v45
    %393 = vmatmul.mubr.f32.gmra.mxu0 %v44
    %v394 = vpop.f32.mrf.mxu0
    %v395 = vadd.f32 %v321, %v394
    %v396 = vpop.f32.mrf.mxu0
    %v397 = vadd.f32 %v325, %v396
    %398 = vmatprep.mubr.f32.mxu0 %v53
    %399 = vmatmul.mubr.f32.gmra.mxu0 %v52
    %v400 = vpop.f32.mrf.mxu0
    %v401 = vadd.f32 %v321, %v400
    %v402 = vpop.f32.mrf.mxu0
    %v403 = vadd.f32 %v325, %v402
    %404 = vdwg.mxu0
    %405 = vmatprep.subr.mxu0 %v155
    %406 = vmatpush1.msra.mxu0 %v154
    %407 = vmatprep.subr.mxu0 %v153
    %408 = vmatpush1.msra.mxu0 %v152
    %409 = vmatprep.subr.mxu0 %v151
    %410 = vmatpush1.msra.mxu0 %v150
    %411 = vmatprep.subr.mxu0 %v149
    %412 = vmatpush1.msra.mxu0 %v148
    %413 = vmatprep.subr.mxu0 %v147
    %414 = vmatpush1.msra.mxu0 %v146
    %415 = vmatprep.subr.mxu0 %v145
    %416 = vmatpush1.msra.mxu0 %v144
    %417 = vmatprep.subr.mxu0 %v143
    %418 = vmatpush1.msra.mxu0 %v142
    %419 = vmatprep.subr.mxu0 %v141
    %420 = vmatpush1.msra.mxu0 %v140
    %421 = vmatprep.subr.mxu0 %v139
    %422 = vmatpush1.msra.mxu0 %v138
    %423 = vmatprep.subr.mxu0 %v137
    %424 = vmatpush1.msra.mxu0 %v136
    %425 = vmatprep.subr.mxu0 %v135
    %426 = vmatpush1.msra.mxu0 %v134
    %427 = vmatprep.subr.mxu0 %v133
    %428 = vmatpush1.msra.mxu0 %v132
    %429 = vmatprep.subr.mxu0 %v131
    %430 = vmatpush1.msra.mxu0 %v130
    %431 = vmatprep.subr.mxu0 %v129
    %432 = vmatpush1.msra.mxu0 %v128
    %433 = vmatprep.subr.mxu0 %v127
    %434 = vmatpush1.msra.mxu0 %v126
    %435 = vmatprep.subr.mxu0 %v125
    %436 = vmatpush1.msra.mxu0 %v124
    %437 = vmatprep.subr.mxu0 %v187
    %438 = vmatpush2.msra.mxu0 %v186
    %439 = vmatprep.subr.mxu0 %v185
    %440 = vmatpush2.msra.mxu0 %v184
    %441 = vmatprep.subr.mxu0 %v183
    %442 = vmatpush2.msra.mxu0 %v182
    %443 = vmatprep.subr.mxu0 %v181
    %444 = vmatpush2.msra.mxu0 %v180
    %445 = vmatprep.subr.mxu0 %v179
    %446 = vmatpush2.msra.mxu0 %v178
    %447 = vmatprep.subr.mxu0 %v177
    %448 = vmatpush2.msra.mxu0 %v176
    %449 = vmatprep.subr.mxu0 %v175
    %450 = vmatpush2.msra.mxu0 %v174
    %451 = vmatprep.subr.mxu0 %v173
    %452 = vmatpush2.msra.mxu0 %v172
    %453 = vmatprep.subr.mxu0 %v171
    %454 = vmatpush2.msra.mxu0 %v170
    %455 = vmatprep.subr.mxu0 %v169
    %456 = vmatpush2.msra.mxu0 %v168
    %457 = vmatprep.subr.mxu0 %v167
    %458 = vmatpush2.msra.mxu0 %v166
    %459 = vmatprep.subr.mxu0 %v165
    %460 = vmatpush2.msra.mxu0 %v164
    %461 = vmatprep.subr.mxu0 %v163
    %462 = vmatpush2.msra.mxu0 %v162
    %463 = vmatprep.subr.mxu0 %v161
    %464 = vmatpush2.msra.mxu0 %v160
    %465 = vmatprep.subr.mxu0 %v159
    %466 = vmatpush2.msra.mxu0 %v158
    %467 = vmatprep.subr.mxu0 %v157
    %468 = vmatpush2.msra.mxu0 %v156
    %469 = vmatprep.mubr.f32.mxu0 %v47
    %470 = vmatmul.mubr.f32.gmra.mxu0 %v46
    %v471 = vpop.f32.mrf.mxu0
    %v472 = vadd.f32 %v395, %v471
    %v473 = vpop.f32.mrf.mxu0
    %v474 = vadd.f32 %v397, %v473
    %475 = vmatprep.mubr.f32.mxu0 %v55
    %476 = vmatmul.mubr.f32.gmra.mxu0 %v54
    %v477 = vpop.f32.mrf.mxu0
    %v478 = vadd.f32 %v401, %v477
    %v479 = vpop.f32.mrf.mxu0
    %v480 = vadd.f32 %v403, %v479
    %481 = vdwg.mxu0
    %482 = vmatprep.subr.mxu0 %v219
    %483 = vmatpush1.msra.mxu0 %v218
    %484 = vmatprep.subr.mxu0 %v217
    %485 = vmatpush1.msra.mxu0 %v216
    %486 = vmatprep.subr.mxu0 %v215
    %487 = vmatpush1.msra.mxu0 %v214
    %488 = vmatprep.subr.mxu0 %v213
    %489 = vmatpush1.msra.mxu0 %v212
    %490 = vmatprep.subr.mxu0 %v211
    %491 = vmatpush1.msra.mxu0 %v210
    %492 = vmatprep.subr.mxu0 %v209
    %493 = vmatpush1.msra.mxu0 %v208
    %494 = vmatprep.subr.mxu0 %v207
    %495 = vmatpush1.msra.mxu0 %v206
    %496 = vmatprep.subr.mxu0 %v205
    %497 = vmatpush1.msra.mxu0 %v204
    %498 = vmatprep.subr.mxu0 %v203
    %499 = vmatpush1.msra.mxu0 %v202
    %500 = vmatprep.subr.mxu0 %v201
    %501 = vmatpush1.msra.mxu0 %v200
    %502 = vmatprep.subr.mxu0 %v199
    %503 = vmatpush1.msra.mxu0 %v198
    %504 = vmatprep.subr.mxu0 %v197
    %505 = vmatpush1.msra.mxu0 %v196
    %506 = vmatprep.subr.mxu0 %v195
    %507 = vmatpush1.msra.mxu0 %v194
    %508 = vmatprep.subr.mxu0 %v193
    %509 = vmatpush1.msra.mxu0 %v192
    %510 = vmatprep.subr.mxu0 %v191
    %511 = vmatpush1.msra.mxu0 %v190
    %512 = vmatprep.subr.mxu0 %v189
    %513 = vmatpush1.msra.mxu0 %v188
    %514 = vmatprep.subr.mxu0 %v251
    %515 = vmatpush2.msra.mxu0 %v250
    %516 = vmatprep.subr.mxu0 %v249
    %517 = vmatpush2.msra.mxu0 %v248
    %518 = vmatprep.subr.mxu0 %v247
    %519 = vmatpush2.msra.mxu0 %v246
    %520 = vmatprep.subr.mxu0 %v245
    %521 = vmatpush2.msra.mxu0 %v244
    %522 = vmatprep.subr.mxu0 %v243
    %523 = vmatpush2.msra.mxu0 %v242
    %524 = vmatprep.subr.mxu0 %v241
    %525 = vmatpush2.msra.mxu0 %v240
    %526 = vmatprep.subr.mxu0 %v239
    %527 = vmatpush2.msra.mxu0 %v238
    %528 = vmatprep.subr.mxu0 %v237
    %529 = vmatpush2.msra.mxu0 %v236
    %530 = vmatprep.subr.mxu0 %v235
    %531 = vmatpush2.msra.mxu0 %v234
    %532 = vmatprep.subr.mxu0 %v233
    %533 = vmatpush2.msra.mxu0 %v232
    %534 = vmatprep.subr.mxu0 %v231
    %535 = vmatpush2.msra.mxu0 %v230
    %536 = vmatprep.subr.mxu0 %v229
    %537 = vmatpush2.msra.mxu0 %v228
    %538 = vmatprep.subr.mxu0 %v227
    %539 = vmatpush2.msra.mxu0 %v226
    %540 = vmatprep.subr.mxu0 %v225
    %541 = vmatpush2.msra.mxu0 %v224
    %542 = vmatprep.subr.mxu0 %v223
    %543 = vmatpush2.msra.mxu0 %v222
    %544 = vmatprep.subr.mxu0 %v221
    %545 = vmatpush2.msra.mxu0 %v220
    %546 = vmatprep.mubr.f32.mxu0 %v49
    %547 = vmatmul.mubr.f32.gmra.mxu0 %v48
    %v548 = vpop.f32.mrf.mxu0
    %v549 = vadd.f32 %v472, %v548
    %v550 = vpop.f32.mrf.mxu0
    %v551 = vadd.f32 %v474, %v550
    %552 = vmatprep.mubr.f32.mxu0 %v57
    %553 = vmatmul.mubr.f32.gmra.mxu0 %v56
    %v554 = vpop.f32.mrf.mxu0
    %v555 = vadd.f32 %v478, %v554
    %v556 = vpop.f32.mrf.mxu0
    %v557 = vadd.f32 %v480, %v556
    %558 = vdwg.mxu0
    %559 = vmatprep.subr.mxu0 %v283
    %560 = vmatpush1.msra.mxu0 %v282
    %561 = vmatprep.subr.mxu0 %v281
    %562 = vmatpush1.msra.mxu0 %v280
    %563 = vmatprep.subr.mxu0 %v279
    %564 = vmatpush1.msra.mxu0 %v278
    %565 = vmatprep.subr.mxu0 %v277
    %566 = vmatpush1.msra.mxu0 %v276
    %567 = vmatprep.subr.mxu0 %v275
    %568 = vmatpush1.msra.mxu0 %v274
    %569 = vmatprep.subr.mxu0 %v273
    %570 = vmatpush1.msra.mxu0 %v272
    %571 = vmatprep.subr.mxu0 %v271
    %572 = vmatpush1.msra.mxu0 %v270
    %573 = vmatprep.subr.mxu0 %v269
    %574 = vmatpush1.msra.mxu0 %v268
    %575 = vmatprep.subr.mxu0 %v267
    %576 = vmatpush1.msra.mxu0 %v266
    %577 = vmatprep.subr.mxu0 %v265
    %578 = vmatpush1.msra.mxu0 %v264
    %579 = vmatprep.subr.mxu0 %v263
    %580 = vmatpush1.msra.mxu0 %v262
    %581 = vmatprep.subr.mxu0 %v261
    %582 = vmatpush1.msra.mxu0 %v260
    %583 = vmatprep.subr.mxu0 %v259
    %584 = vmatpush1.msra.mxu0 %v258
    %585 = vmatprep.subr.mxu0 %v257
    %586 = vmatpush1.msra.mxu0 %v256
    %587 = vmatprep.subr.mxu0 %v255
    %588 = vmatpush1.msra.mxu0 %v254
    %589 = vmatprep.subr.mxu0 %v253
    %590 = vmatpush1.msra.mxu0 %v252
    %591 = vmatprep.subr.mxu0 %v315
    %592 = vmatpush2.msra.mxu0 %v314
    %593 = vmatprep.subr.mxu0 %v313
    %594 = vmatpush2.msra.mxu0 %v312
    %595 = vmatprep.subr.mxu0 %v311
    %596 = vmatpush2.msra.mxu0 %v310
    %597 = vmatprep.subr.mxu0 %v309
    %598 = vmatpush2.msra.mxu0 %v308
    %599 = vmatprep.subr.mxu0 %v307
    %600 = vmatpush2.msra.mxu0 %v306
    %601 = vmatprep.subr.mxu0 %v305
    %602 = vmatpush2.msra.mxu0 %v304
    %603 = vmatprep.subr.mxu0 %v303
    %604 = vmatpush2.msra.mxu0 %v302
    %605 = vmatprep.subr.mxu0 %v301
    %606 = vmatpush2.msra.mxu0 %v300
    %607 = vmatprep.subr.mxu0 %v299
    %608 = vmatpush2.msra.mxu0 %v298
    %609 = vmatprep.subr.mxu0 %v297
    %610 = vmatpush2.msra.mxu0 %v296
    %611 = vmatprep.subr.mxu0 %v295
    %612 = vmatpush2.msra.mxu0 %v294
    %613 = vmatprep.subr.mxu0 %v293
    %614 = vmatpush2.msra.mxu0 %v292
    %615 = vmatprep.subr.mxu0 %v291
    %616 = vmatpush2.msra.mxu0 %v290
    %617 = vmatprep.subr.mxu0 %v289
    %618 = vmatpush2.msra.mxu0 %v288
    %619 = vmatprep.subr.mxu0 %v287
    %620 = vmatpush2.msra.mxu0 %v286
    %621 = vmatprep.subr.mxu0 %v285
    %622 = vmatpush2.msra.mxu0 %v284
    %623 = vmatprep.mubr.f32.mxu0 %v51
    %624 = vmatmul.mubr.f32.gmra.mxu0 %v50
    %v625 = vpop.f32.mrf.mxu0
    %v626 = vadd.f32 %v549, %v625
    %v627 = vpop.f32.mrf.mxu0
    %v628 = vadd.f32 %v551, %v627
    %629 = vmatprep.mubr.f32.mxu0 %v59
    %630 = vmatmul.mubr.f32.gmra.mxu0 %v58
    %v631 = vpop.f32.mrf.mxu0
    %v632 = vadd.f32 %v555, %v631
    %v633 = vpop.f32.mrf.mxu0
    %v634 = vadd.f32 %v557, %v633
    %635 = vdwg.mxu0
    %v636 = vld [vmem:[%s3] sm:$0xff]
    %v637 = vld [vmem:[%s3 + $0x8] sm:$0xff]
    %v638 = vld [vmem:[%s3 + $0x10] sm:$0xff]
    %v639 = vld [vmem:[%s3 + $0x18] sm:$0xff]
    %v640 = vld [vmem:[%s3 + $0x20] sm:$0xff]
    %v641 = vld [vmem:[%s3 + $0x28] sm:$0xff]
    %v642 = vld [vmem:[%s3 + $0x30] sm:$0xff]
    %v643 = vld [vmem:[%s3 + $0x38] sm:$0xff]
    %v644 = vld [vmem:[%s3 + $0x40] sm:$0xff]
    %v645 = vld [vmem:[%s3 + $0x48] sm:$0xff]
    %v646 = vld [vmem:[%s3 + $0x50] sm:$0xff]
    %v647 = vld [vmem:[%s3 + $0x58] sm:$0xff]
    %v648 = vld [vmem:[%s3 + $0x60] sm:$0xff]
    %v649 = vld [vmem:[%s3 + $0x68] sm:$0xff]
    %v650 = vld [vmem:[%s3 + $0x70] sm:$0xff]
    %v651 = vld [vmem:[%s3 + $0x78] sm:$0xff]
    %v652 = vld [vmem:[%s3 + $0x80] sm:$0xff]
    %v653 = vld [vmem:[%s3 + $0x88] sm:$0xff]
    %v654 = vld [vmem:[%s3 + $0x90] sm:$0xff]
    %v655 = vld [vmem:[%s3 + $0x98] sm:$0xff]
    %v656 = vld [vmem:[%s3 + $0xa0] sm:$0xff]
    %v657 = vld [vmem:[%s3 + $0xa8] sm:$0xff]
    %v658 = vld [vmem:[%s3 + $0xb0] sm:$0xff]
    %v659 = vld [vmem:[%s3 + $0xb8] sm:$0xff]
    %v660 = vld [vmem:[%s3 + $0xc0] sm:$0xff]
    %v661 = vld [vmem:[%s3 + $0xc8] sm:$0xff]
    %v662 = vld [vmem:[%s3 + $0xd0] sm:$0xff]
    %v663 = vld [vmem:[%s3 + $0xd8] sm:$0xff]
    %v664 = vld [vmem:[%s3 + $0xe0] sm:$0xff]
    %v665 = vld [vmem:[%s3 + $0xe8] sm:$0xff]
    %v666 = vld [vmem:[%s3 + $0xf0] sm:$0xff]
    %v667 = vld [vmem:[%s3 + $0xf8] sm:$0xff]
    %v668 = vld [vmem:[%s3 + $0x100] sm:$0xff]
    %v669 = vld [vmem:[%s3 + $0x108] sm:$0xff]
    %v670 = vld [vmem:[%s3 + $0x110] sm:$0xff]
    %v671 = vld [vmem:[%s3 + $0x118] sm:$0xff]
    %v672 = vld [vmem:[%s3 + $0x120] sm:$0xff]
    %v673 = vld [vmem:[%s3 + $0x128] sm:$0xff]
    %v674 = vld [vmem:[%s3 + $0x130] sm:$0xff]
    %v675 = vld [vmem:[%s3 + $0x138] sm:$0xff]
    %v676 = vld [vmem:[%s3 + $0x140] sm:$0xff]
    %v677 = vld [vmem:[%s3 + $0x148] sm:$0xff]
    %v678 = vld [vmem:[%s3 + $0x150] sm:$0xff]
    %v679 = vld [vmem:[%s3 + $0x158] sm:$0xff]
    %v680 = vld [vmem:[%s3 + $0x160] sm:$0xff]
    %v681 = vld [vmem:[%s3 + $0x168] sm:$0xff]
    %v682 = vld [vmem:[%s3 + $0x170] sm:$0xff]
    %v683 = vld [vmem:[%s3 + $0x178] sm:$0xff]
    %v684 = vld [vmem:[%s3 + $0x180] sm:$0xff]
    %v685 = vld [vmem:[%s3 + $0x188] sm:$0xff]
    %v686 = vld [vmem:[%s3 + $0x190] sm:$0xff]
    %v687 = vld [vmem:[%s3 + $0x198] sm:$0xff]
    %v688 = vld [vmem:[%s3 + $0x1a0] sm:$0xff]
    %v689 = vld [vmem:[%s3 + $0x1a8] sm:$0xff]
    %v690 = vld [vmem:[%s3 + $0x1b0] sm:$0xff]
    %v691 = vld [vmem:[%s3 + $0x1b8] sm:$0xff]
    %v692 = vld [vmem:[%s3 + $0x1c0] sm:$0xff]
    %v693 = vld [vmem:[%s3 + $0x1c8] sm:$0xff]
    %v694 = vld [vmem:[%s3 + $0x1d0] sm:$0xff]
    %v695 = vld [vmem:[%s3 + $0x1d8] sm:$0xff]
    %v696 = vld [vmem:[%s3 + $0x1e0] sm:$0xff]
    %v697 = vld [vmem:[%s3 + $0x1e8] sm:$0xff]
    %v698 = vld [vmem:[%s3 + $0x1f0] sm:$0xff]
    %v699 = vld [vmem:[%s3 + $0x1f8] sm:$0xff]
    %v700 = vld [vmem:[%s4] ss:$4 sm:$0x3]
    %v702 = vlaneseq
    %v703 = vshrl.u32 %v702, 7
    %v704 = vsub.s32 0, %v703
    %v705 = vrot.slane %v700, %v704
    %v706 = vlaneseq
    %v707 = vshrl.u32 %v706, 7
    %v708 = vsub.s32 1, %v707
    %v709 = vrot.slane %v700, %v708
    %712 = vmatprep.subr.mxu0 %v667
    %713 = vmatpush1.msra.mxu0 %v666
    %714 = vmatprep.subr.mxu0 %v665
    %715 = vmatpush1.msra.mxu0 %v664
    %716 = vmatprep.subr.mxu0 %v663
    %717 = vmatpush1.msra.mxu0 %v662
    %718 = vmatprep.subr.mxu0 %v661
    %719 = vmatpush1.msra.mxu0 %v660
    %720 = vmatprep.subr.mxu0 %v659
    %721 = vmatpush1.msra.mxu0 %v658
    %722 = vmatprep.subr.mxu0 %v657
    %723 = vmatpush1.msra.mxu0 %v656
    %724 = vmatprep.subr.mxu0 %v655
    %725 = vmatpush1.msra.mxu0 %v654
    %726 = vmatprep.subr.mxu0 %v653
    %727 = vmatpush1.msra.mxu0 %v652
    %728 = vmatprep.subr.mxu0 %v651
    %729 = vmatpush1.msra.mxu0 %v650
    %730 = vmatprep.subr.mxu0 %v649
    %731 = vmatpush1.msra.mxu0 %v648
    %732 = vmatprep.subr.mxu0 %v647
    %733 = vmatpush1.msra.mxu0 %v646
    %734 = vmatprep.subr.mxu0 %v645
    %735 = vmatpush1.msra.mxu0 %v644
    %736 = vmatprep.subr.mxu0 %v643
    %737 = vmatpush1.msra.mxu0 %v642
    %738 = vmatprep.subr.mxu0 %v641
    %739 = vmatpush1.msra.mxu0 %v640
    %740 = vmatprep.subr.mxu0 %v639
    %741 = vmatpush1.msra.mxu0 %v638
    %742 = vmatprep.subr.mxu0 %v637
    %743 = vmatpush1.msra.mxu0 %v636
    %744 = vmatprep.subr.mxu0 %v699
    %745 = vmatpush2.msra.mxu0 %v698
    %746 = vmatprep.subr.mxu0 %v697
    %747 = vmatpush2.msra.mxu0 %v696
    %748 = vmatprep.subr.mxu0 %v695
    %749 = vmatpush2.msra.mxu0 %v694
    %750 = vmatprep.subr.mxu0 %v693
    %751 = vmatpush2.msra.mxu0 %v692
    %752 = vmatprep.subr.mxu0 %v691
    %753 = vmatpush2.msra.mxu0 %v690
    %754 = vmatprep.subr.mxu0 %v689
    %755 = vmatpush2.msra.mxu0 %v688
    %756 = vmatprep.subr.mxu0 %v687
    %757 = vmatpush2.msra.mxu0 %v686
    %758 = vmatprep.subr.mxu0 %v685
    %759 = vmatpush2.msra.mxu0 %v684
    %760 = vmatprep.subr.mxu0 %v683
    %761 = vmatpush2.msra.mxu0 %v682
    %762 = vmatprep.subr.mxu0 %v681
    %763 = vmatpush2.msra.mxu0 %v680
    %764 = vmatprep.subr.mxu0 %v679
    %765 = vmatpush2.msra.mxu0 %v678
    %766 = vmatprep.subr.mxu0 %v677
    %767 = vmatpush2.msra.mxu0 %v676
    %768 = vmatprep.subr.mxu0 %v675
    %769 = vmatpush2.msra.mxu0 %v674
    %770 = vmatprep.subr.mxu0 %v673
    %771 = vmatpush2.msra.mxu0 %v672
    %772 = vmatprep.subr.mxu0 %v671
    %773 = vmatpush2.msra.mxu0 %v670
    %774 = vmatprep.subr.mxu0 %v669
    %775 = vmatpush2.msra.mxu0 %v668
    %776 = vmatprep.mubr.f32.mxu0 %v628
    %777 = vmatmul.mubr.f32.gmra.mxu0 %v626
    %v778 = vpop.f32.mrf.mxu0
    %v779 = vadd.f32 %v705, %v778
    %v780 = vpop.f32.mrf.mxu0
    %v781 = vadd.f32 %v709, %v780
    %782 = vmatprep.mubr.f32.mxu0 %v634
    %783 = vmatmul.mubr.f32.gmra.mxu0 %v632
    %v784 = vpop.f32.mrf.mxu0
    %v785 = vadd.f32 %v705, %v784
    %v786 = vpop.f32.mrf.mxu0
    %v787 = vadd.f32 %v709, %v786
    %788 = vdwg.mxu0
    %s789 = scalar_lea.vmem %s4, 1
    %v790 = vld [vmem:[%s789] ss:$4 sm:$0x3]
    %s791 = scalar_lea.vmem %s4, 2
    %v792 = vld [vmem:[%s791] ss:$4 sm:$0x3]
    %v793 = vrot.slane %v779, 4
    %v794 = vadd.f32 %v779, %v793
    %v795 = vrot.slane %v794, 2
    %v796 = vadd.f32 %v794, %v795
    %v797 = vrot.slane %v796, 1
    %v798 = vadd.f32 %v796, %v797
    %v799 = vrot.slane %v781, 4
    %v800 = vadd.f32 %v781, %v799
    %v801 = vrot.slane %v800, 2
    %v802 = vadd.f32 %v800, %v801
    %v803 = vrot.slane %v802, 1
    %v804 = vadd.f32 %v802, %v803
    %v805 = vrcp.pop 8.0
    %v806 = vmul.f32 %v798, %v805
    %v807 = vmul.f32 %v804, %v805
    %v808 = vrot.slane %v785, 4
    %v809 = vadd.f32 %v785, %v808
    %v810 = vrot.slane %v809, 2
    %v811 = vadd.f32 %v809, %v810
    %v812 = vrot.slane %v811, 1
    %v813 = vadd.f32 %v811, %v812
    %v814 = vrot.slane %v787, 4
    %v815 = vadd.f32 %v787, %v814
    %v816 = vrot.slane %v815, 2
    %v817 = vadd.f32 %v815, %v816
    %v818 = vrot.slane %v817, 1
    %v819 = vadd.f32 %v817, %v818
    %v820 = vmul.f32 %v813, %v805
    %v821 = vmul.f32 %v819, %v805
    %v822 = vmul.f32 %v779, %v779
    %v823 = vmul.f32 %v781, %v781
    %v824 = vrot.slane %v822, 4
    %v825 = vadd.f32 %v822, %v824
    %v826 = vrot.slane %v825, 2
    %v827 = vadd.f32 %v825, %v826
    %v828 = vrot.slane %v827, 1
    %v829 = vadd.f32 %v827, %v828
    %v830 = vrot.slane %v823, 4
    %v831 = vadd.f32 %v823, %v830
    %v832 = vrot.slane %v831, 2
    %v833 = vadd.f32 %v831, %v832
    %v834 = vrot.slane %v833, 1
    %v835 = vadd.f32 %v833, %v834
    %v836 = vmul.f32 %v829, %v805
    %v837 = vmul.f32 %v835, %v805
    %v838 = vmul.f32 %v806, %v806
    %v839 = vmul.f32 %v807, %v807
    %v840 = vsub.f32 %v836, %v838
    %v841 = vsub.f32 %v837, %v839
    %v842 = vmax.f32 %v840, 0.0
    %v843 = vmax.f32 %v841, 0.0
    %v844 = vmul.f32 %v785, %v785
    %v845 = vmul.f32 %v787, %v787
    %v846 = vrot.slane %v844, 4
    %v847 = vadd.f32 %v844, %v846
    %v848 = vrot.slane %v847, 2
    %v849 = vadd.f32 %v847, %v848
    %v850 = vrot.slane %v849, 1
    %v851 = vadd.f32 %v849, %v850
    %v852 = vrot.slane %v845, 4
    %v853 = vadd.f32 %v845, %v852
    %v854 = vrot.slane %v853, 2
    %v855 = vadd.f32 %v853, %v854
    %v856 = vrot.slane %v855, 1
    %v857 = vadd.f32 %v855, %v856
    %v858 = vmul.f32 %v851, %v805
    %v859 = vmul.f32 %v857, %v805
    %v860 = vmul.f32 %v820, %v820
    %v861 = vmul.f32 %v821, %v821
    %v862 = vsub.f32 %v858, %v860
    %v863 = vsub.f32 %v859, %v861
    %v864 = vmax.f32 %v862, 0.0
    %v865 = vmax.f32 %v863, 0.0
    %v866 = vsel %vm42, 1, 0
    %v867 = vsel %vm43, 1, 0
    %vm868 = vcmp.eq.s32.totalorder %v866, 1
    %vm869 = vcmp.eq.s32.totalorder %v867, 1
    %v870 = vsel %vm868, %v806, %v820
    %v871 = vsel %vm868, %v807, %v821
    %v872 = vsel %vm869, %v806, %v820
    %v873 = vsel %vm869, %v807, %v821
    %v874 = vsel %vm868, %v842, %v864
    %v875 = vsel %vm868, %v843, %v865
    %v876 = vsel %vm869, %v842, %v864
    %v877 = vsel %vm869, %v843, %v865
    %v878 = vsub.f32 %v779, %v870
    %v879 = vsub.f32 %v781, %v871
    %v880 = vsub.f32 %v785, %v872
    %v881 = vsub.f32 %v787, %v873
    %v882 = vadd.f32 %v874, 1e-05
    %v883 = vadd.f32 %v875, 1e-05
    %v884 = vadd.f32 %v876, 1e-05
    %v885 = vadd.f32 %v877, 1e-05
    %v886 = vrsqrt.pop %v882
    %v887 = vrsqrt.pop %v883
    %v888 = vrsqrt.pop %v884
    %v889 = vrsqrt.pop %v885
    %v890 = vmul.f32 %v878, %v886
    %v891 = vmul.f32 %v879, %v887
    %v892 = vmul.f32 %v880, %v888
    %v893 = vmul.f32 %v881, %v889
    %v895 = vlaneseq
    %v896 = vshrl.u32 %v895, 7
    %v897 = vsub.s32 0, %v896
    %v898 = vrot.slane %v790, %v897
    %v899 = vlaneseq
    %v900 = vshrl.u32 %v899, 7
    %v901 = vsub.s32 1, %v900
    %v902 = vrot.slane %v790, %v901
    %v905 = vmul.f32 %v890, %v898
    %v906 = vmul.f32 %v891, %v902
    %v907 = vmul.f32 %v892, %v898
    %v908 = vmul.f32 %v893, %v902
    %v910 = vlaneseq
    %v911 = vshrl.u32 %v910, 7
    %v912 = vsub.s32 0, %v911
    %v913 = vrot.slane %v792, %v912
    %v914 = vlaneseq
    %v915 = vshrl.u32 %v914, 7
    %v916 = vsub.s32 1, %v915
    %v917 = vrot.slane %v792, %v916
    %v920 = vadd.f32 %v905, %v913
    %v921 = vadd.f32 %v906, %v917
    %v922 = vadd.f32 %v907, %v913
    %v923 = vadd.f32 %v908, %v917
    %v924 = vmax.f32 %v920, 0.0
    %v925 = vmax.f32 %v921, 0.0
    %v926 = vmax.f32 %v922, 0.0
    %v927 = vmax.f32 %v923, 0.0
    %v928 = vld [vmem:[%s5] sm:$0xff]
    %v929 = vld [vmem:[%s5 + $0x8] sm:$0xff]
    %v930 = vld [vmem:[%s5 + $0x10] sm:$0xff]
    %v931 = vld [vmem:[%s5 + $0x18] sm:$0xff]
    %v932 = vld [vmem:[%s5 + $0x20] sm:$0xff]
    %v933 = vld [vmem:[%s5 + $0x28] sm:$0xff]
    %v934 = vld [vmem:[%s5 + $0x30] sm:$0xff]
    %v935 = vld [vmem:[%s5 + $0x38] sm:$0xff]
    %v936 = vld [vmem:[%s5 + $0x40] sm:$0xff]
    %v937 = vld [vmem:[%s5 + $0x48] sm:$0xff]
    %v938 = vld [vmem:[%s5 + $0x50] sm:$0xff]
    %v939 = vld [vmem:[%s5 + $0x58] sm:$0xff]
    %v940 = vld [vmem:[%s5 + $0x60] sm:$0xff]
    %v941 = vld [vmem:[%s5 + $0x68] sm:$0xff]
    %v942 = vld [vmem:[%s5 + $0x70] sm:$0xff]
    %v943 = vld [vmem:[%s5 + $0x78] sm:$0xff]
    %v944 = vld [vmem:[%s5 + $0x80] sm:$0xff]
    %v945 = vld [vmem:[%s5 + $0x88] sm:$0xff]
    %v946 = vld [vmem:[%s5 + $0x90] sm:$0xff]
    %v947 = vld [vmem:[%s5 + $0x98] sm:$0xff]
    %v948 = vld [vmem:[%s5 + $0xa0] sm:$0xff]
    %v949 = vld [vmem:[%s5 + $0xa8] sm:$0xff]
    %v950 = vld [vmem:[%s5 + $0xb0] sm:$0xff]
    %v951 = vld [vmem:[%s5 + $0xb8] sm:$0xff]
    %v952 = vld [vmem:[%s5 + $0xc0] sm:$0xff]
    %v953 = vld [vmem:[%s5 + $0xc8] sm:$0xff]
    %v954 = vld [vmem:[%s5 + $0xd0] sm:$0xff]
    %v955 = vld [vmem:[%s5 + $0xd8] sm:$0xff]
    %v956 = vld [vmem:[%s5 + $0xe0] sm:$0xff]
    %v957 = vld [vmem:[%s5 + $0xe8] sm:$0xff]
    %v958 = vld [vmem:[%s5 + $0xf0] sm:$0xff]
    %v959 = vld [vmem:[%s5 + $0xf8] sm:$0xff]
    %v960 = vld [vmem:[%s5 + $0x100] sm:$0xff]
    %v961 = vld [vmem:[%s5 + $0x108] sm:$0xff]
    %v962 = vld [vmem:[%s5 + $0x110] sm:$0xff]
    %v963 = vld [vmem:[%s5 + $0x118] sm:$0xff]
    %v964 = vld [vmem:[%s5 + $0x120] sm:$0xff]
    %v965 = vld [vmem:[%s5 + $0x128] sm:$0xff]
    %v966 = vld [vmem:[%s5 + $0x130] sm:$0xff]
    %v967 = vld [vmem:[%s5 + $0x138] sm:$0xff]
    %v968 = vld [vmem:[%s5 + $0x140] sm:$0xff]
    %v969 = vld [vmem:[%s5 + $0x148] sm:$0xff]
    %v970 = vld [vmem:[%s5 + $0x150] sm:$0xff]
    %v971 = vld [vmem:[%s5 + $0x158] sm:$0xff]
    %v972 = vld [vmem:[%s5 + $0x160] sm:$0xff]
    %v973 = vld [vmem:[%s5 + $0x168] sm:$0xff]
    %v974 = vld [vmem:[%s5 + $0x170] sm:$0xff]
    %v975 = vld [vmem:[%s5 + $0x178] sm:$0xff]
    %v976 = vld [vmem:[%s5 + $0x180] sm:$0xff]
    %v977 = vld [vmem:[%s5 + $0x188] sm:$0xff]
    %v978 = vld [vmem:[%s5 + $0x190] sm:$0xff]
    %v979 = vld [vmem:[%s5 + $0x198] sm:$0xff]
    %v980 = vld [vmem:[%s5 + $0x1a0] sm:$0xff]
    %v981 = vld [vmem:[%s5 + $0x1a8] sm:$0xff]
    %v982 = vld [vmem:[%s5 + $0x1b0] sm:$0xff]
    %v983 = vld [vmem:[%s5 + $0x1b8] sm:$0xff]
    %v984 = vld [vmem:[%s5 + $0x1c0] sm:$0xff]
    %v985 = vld [vmem:[%s5 + $0x1c8] sm:$0xff]
    %v986 = vld [vmem:[%s5 + $0x1d0] sm:$0xff]
    %v987 = vld [vmem:[%s5 + $0x1d8] sm:$0xff]
    %v988 = vld [vmem:[%s5 + $0x1e0] sm:$0xff]
    %v989 = vld [vmem:[%s5 + $0x1e8] sm:$0xff]
    %v990 = vld [vmem:[%s5 + $0x1f0] sm:$0xff]
    %v991 = vld [vmem:[%s5 + $0x1f8] sm:$0xff]
    %v992 = vld [vmem:[%s6] sm:$0x3]
    %v994 = vlaneseq
    %v995 = vshrl.u32 %v994, 7
    %v996 = vsub.s32 0, %v995
    %v997 = vrot.slane %v992, %v996
    %v998 = vlaneseq
    %v999 = vshrl.u32 %v998, 7
    %v1000 = vsub.s32 1, %v999
    %v1001 = vrot.slane %v992, %v1000
    %1004 = vmatprep.subr.mxu0 %v959
    %1005 = vmatpush1.msra.mxu0 %v958
    %1006 = vmatprep.subr.mxu0 %v957
    %1007 = vmatpush1.msra.mxu0 %v956
    %1008 = vmatprep.subr.mxu0 %v955
    %1009 = vmatpush1.msra.mxu0 %v954
    %1010 = vmatprep.subr.mxu0 %v953
    %1011 = vmatpush1.msra.mxu0 %v952
    %1012 = vmatprep.subr.mxu0 %v951
    %1013 = vmatpush1.msra.mxu0 %v950
    %1014 = vmatprep.subr.mxu0 %v949
    %1015 = vmatpush1.msra.mxu0 %v948
    %1016 = vmatprep.subr.mxu0 %v947
    %1017 = vmatpush1.msra.mxu0 %v946
    %1018 = vmatprep.subr.mxu0 %v945
    %1019 = vmatpush1.msra.mxu0 %v944
    %1020 = vmatprep.subr.mxu0 %v943
    %1021 = vmatpush1.msra.mxu0 %v942
    %1022 = vmatprep.subr.mxu0 %v941
    %1023 = vmatpush1.msra.mxu0 %v940
    %1024 = vmatprep.subr.mxu0 %v939
    %1025 = vmatpush1.msra.mxu0 %v938
    %1026 = vmatprep.subr.mxu0 %v937
    %1027 = vmatpush1.msra.mxu0 %v936
    %1028 = vmatprep.subr.mxu0 %v935
    %1029 = vmatpush1.msra.mxu0 %v934
    %1030 = vmatprep.subr.mxu0 %v933
    %1031 = vmatpush1.msra.mxu0 %v932
    %1032 = vmatprep.subr.mxu0 %v931
    %1033 = vmatpush1.msra.mxu0 %v930
    %1034 = vmatprep.subr.mxu0 %v929
    %1035 = vmatpush1.msra.mxu0 %v928
    %1036 = vmatprep.subr.mxu0 %v991
    %1037 = vmatpush2.msra.mxu0 %v990
    %1038 = vmatprep.subr.mxu0 %v989
    %1039 = vmatpush2.msra.mxu0 %v988
    %1040 = vmatprep.subr.mxu0 %v987
    %1041 = vmatpush2.msra.mxu0 %v986
    %1042 = vmatprep.subr.mxu0 %v985
    %1043 = vmatpush2.msra.mxu0 %v984
    %1044 = vmatprep.subr.mxu0 %v983
    %1045 = vmatpush2.msra.mxu0 %v982
    %1046 = vmatprep.subr.mxu0 %v981
    %1047 = vmatpush2.msra.mxu0 %v980
    %1048 = vmatprep.subr.mxu0 %v979
    %1049 = vmatpush2.msra.mxu0 %v978
    %1050 = vmatprep.subr.mxu0 %v977
    %1051 = vmatpush2.msra.mxu0 %v976
    %1052 = vmatprep.subr.mxu0 %v975
    %1053 = vmatpush2.msra.mxu0 %v974
    %1054 = vmatprep.subr.mxu0 %v973
    %1055 = vmatpush2.msra.mxu0 %v972
    %1056 = vmatprep.subr.mxu0 %v971
    %1057 = vmatpush2.msra.mxu0 %v970
    %1058 = vmatprep.subr.mxu0 %v969
    %1059 = vmatpush2.msra.mxu0 %v968
    %1060 = vmatprep.subr.mxu0 %v967
    %1061 = vmatpush2.msra.mxu0 %v966
    %1062 = vmatprep.subr.mxu0 %v965
    %1063 = vmatpush2.msra.mxu0 %v964
    %1064 = vmatprep.subr.mxu0 %v963
    %1065 = vmatpush2.msra.mxu0 %v962
    %1066 = vmatprep.subr.mxu0 %v961
    %1067 = vmatpush2.msra.mxu0 %v960
    %1068 = vmatprep.mubr.f32.mxu0 %v925
    %1069 = vmatmul.mubr.f32.gmra.mxu0 %v924
    %v1070 = vpop.f32.mrf.mxu0
    %v1071 = vadd.f32 %v997, %v1070
    %v1072 = vpop.f32.mrf.mxu0
    %v1073 = vadd.f32 %v1001, %v1072
    %1074 = vmatprep.mubr.f32.mxu0 %v927
    %1075 = vmatmul.mubr.f32.gmra.mxu0 %v926
    %v1076 = vpop.f32.mrf.mxu0
    %v1077 = vadd.f32 %v997, %v1076
    %v1078 = vpop.f32.mrf.mxu0
    %v1079 = vadd.f32 %v1001, %v1078
    %1080 = vdwg.mxu0
    %v1081 = vld [vmem:[%s7] sm:$0xff]
    %v1082 = vld [vmem:[%s7 + $0x8] sm:$0xff]
    %v1083 = vld [vmem:[%s7 + $0x10] sm:$0xff]
    %v1084 = vld [vmem:[%s7 + $0x18] sm:$0xff]
    %v1085 = vld [vmem:[%s7 + $0x20] sm:$0xff]
    %v1086 = vld [vmem:[%s7 + $0x28] sm:$0xff]
    %v1087 = vld [vmem:[%s7 + $0x30] sm:$0xff]
    %v1088 = vld [vmem:[%s7 + $0x38] sm:$0xff]
    %v1089 = vld [vmem:[%s7 + $0x40] sm:$0xff]
    %v1090 = vld [vmem:[%s7 + $0x48] sm:$0xff]
    %v1091 = vld [vmem:[%s7 + $0x50] sm:$0xff]
    %v1092 = vld [vmem:[%s7 + $0x58] sm:$0xff]
    %v1093 = vld [vmem:[%s7 + $0x60] sm:$0xff]
    %v1094 = vld [vmem:[%s7 + $0x68] sm:$0xff]
    %v1095 = vld [vmem:[%s7 + $0x70] sm:$0xff]
    %v1096 = vld [vmem:[%s7 + $0x78] sm:$0xff]
    %v1097 = vld [vmem:[%s8] sm:$0x1]
    %v1098 = vlaneseq
    %v1099 = vshrl.u32 %v1098, 7
    %v1100 = vsub.s32 0, %v1099
    %v1101 = vrot.slane %v1097, %v1100
    %1102 = vmatprep.subr.mxu0 0.0
    %1103 = vmatpush1.msra.mxu0 %v1096
    %1104 = vmatprep.subr.mxu0 0.0
    %1105 = vmatpush1.msra.mxu0 %v1095
    %1106 = vmatprep.subr.mxu0 0.0
    %1107 = vmatpush1.msra.mxu0 %v1094
    %1108 = vmatprep.subr.mxu0 0.0
    %1109 = vmatpush1.msra.mxu0 %v1093
    %1110 = vmatprep.subr.mxu0 0.0
    %1111 = vmatpush1.msra.mxu0 %v1092
    %1112 = vmatprep.subr.mxu0 0.0
    %1113 = vmatpush1.msra.mxu0 %v1091
    %1114 = vmatprep.subr.mxu0 0.0
    %1115 = vmatpush1.msra.mxu0 %v1090
    %1116 = vmatprep.subr.mxu0 0.0
    %1117 = vmatpush1.msra.mxu0 %v1089
    %1118 = vmatprep.subr.mxu0 0.0
    %1119 = vmatpush1.msra.mxu0 %v1088
    %1120 = vmatprep.subr.mxu0 0.0
    %1121 = vmatpush1.msra.mxu0 %v1087
    %1122 = vmatprep.subr.mxu0 0.0
    %1123 = vmatpush1.msra.mxu0 %v1086
    %1124 = vmatprep.subr.mxu0 0.0
    %1125 = vmatpush1.msra.mxu0 %v1085
    %1126 = vmatprep.subr.mxu0 0.0
    %1127 = vmatpush1.msra.mxu0 %v1084
    %1128 = vmatprep.subr.mxu0 0.0
    %1129 = vmatpush1.msra.mxu0 %v1083
    %1130 = vmatprep.subr.mxu0 0.0
    %1131 = vmatpush1.msra.mxu0 %v1082
    %1132 = vmatprep.subr.mxu0 0.0
    %1133 = vmatpush1.msra.mxu0 %v1081
    %1134 = vmatprep.subr.mxu0 0.0
    %1135 = vmatpush2.msra.mxu0 0.0
    %1136 = vmatprep.subr.mxu0 0.0
    %1137 = vmatpush2.msra.mxu0 0.0
    %1138 = vmatprep.subr.mxu0 0.0
    %1139 = vmatpush2.msra.mxu0 0.0
    %1140 = vmatprep.subr.mxu0 0.0
    %1141 = vmatpush2.msra.mxu0 0.0
    %1142 = vmatprep.subr.mxu0 0.0
    %1143 = vmatpush2.msra.mxu0 0.0
    %1144 = vmatprep.subr.mxu0 0.0
    %1145 = vmatpush2.msra.mxu0 0.0
    %1146 = vmatprep.subr.mxu0 0.0
    %1147 = vmatpush2.msra.mxu0 0.0
    %1148 = vmatprep.subr.mxu0 0.0
    %1149 = vmatpush2.msra.mxu0 0.0
    %1150 = vmatprep.subr.mxu0 0.0
    %1151 = vmatpush2.msra.mxu0 0.0
    %1152 = vmatprep.subr.mxu0 0.0
    %1153 = vmatpush2.msra.mxu0 0.0
    %1154 = vmatprep.subr.mxu0 0.0
    %1155 = vmatpush2.msra.mxu0 0.0
    %1156 = vmatprep.subr.mxu0 0.0
    %1157 = vmatpush2.msra.mxu0 0.0
    %1158 = vmatprep.subr.mxu0 0.0
    %1159 = vmatpush2.msra.mxu0 0.0
    %1160 = vmatprep.subr.mxu0 0.0
    %1161 = vmatpush2.msra.mxu0 0.0
    %1162 = vmatprep.subr.mxu0 0.0
    %1163 = vmatpush2.msra.mxu0 0.0
    %1164 = vmatprep.subr.mxu0 0.0
    %1165 = vmatpush2.msra.mxu0 0.0
    %1166 = vmatprep.mubr.f32.mxu0 0.0
    %1167 = vmatmul.mubr.f32.gmra.mxu0 %v1071
    %v1168 = vpop.f32.mrf.mxu0
    %v1169 = vadd.f32 %v1101, %v1168
    %v1170 = vpop.f32.mrf.mxu0
    %1171 = vmatprep.mubr.f32.mxu0 0.0
    %1172 = vmatmul.mubr.f32.gmra.mxu0 %v1077
    %v1173 = vpop.f32.mrf.mxu0
    %v1174 = vadd.f32 %v1101, %v1173
    %v1175 = vpop.f32.mrf.mxu0
    %1176 = vdwg.mxu0
    %v1177 = vld [vmem:[%s8 + $0x1] sm:$0x1]
    %v1178 = vld [vmem:[%s8 + $0x2] sm:$0x1]
    %v1179 = vrot.slane %v1169, 4
    %v1180 = vadd.f32 %v1169, %v1179
    %v1181 = vrot.slane %v1180, 2
    %v1182 = vadd.f32 %v1180, %v1181
    %v1183 = vrot.slane %v1182, 1
    %v1184 = vadd.f32 %v1182, %v1183
    %v1185 = vmul.f32 %v1184, %v805
    %v1186 = vrot.slane %v1174, 4
    %v1187 = vadd.f32 %v1174, %v1186
    %v1188 = vrot.slane %v1187, 2
    %v1189 = vadd.f32 %v1187, %v1188
    %v1190 = vrot.slane %v1189, 1
    %v1191 = vadd.f32 %v1189, %v1190
    %v1192 = vmul.f32 %v1191, %v805
    %v1193 = vmul.f32 %v1169, %v1169
    %v1194 = vrot.slane %v1193, 4
    %v1195 = vadd.f32 %v1193, %v1194
    %v1196 = vrot.slane %v1195, 2
    %v1197 = vadd.f32 %v1195, %v1196
    %v1198 = vrot.slane %v1197, 1
    %v1199 = vadd.f32 %v1197, %v1198
    %v1200 = vmul.f32 %v1199, %v805
    %v1201 = vmul.f32 %v1185, %v1185
    %v1202 = vsub.f32 %v1200, %v1201
    %v1203 = vmax.f32 %v1202, 0.0
    %v1204 = vmul.f32 %v1174, %v1174
    %v1205 = vrot.slane %v1204, 4
    %v1206 = vadd.f32 %v1204, %v1205
    %v1207 = vrot.slane %v1206, 2
    %v1208 = vadd.f32 %v1206, %v1207
    %v1209 = vrot.slane %v1208, 1
    %v1210 = vadd.f32 %v1208, %v1209
    %v1211 = vmul.f32 %v1210, %v805
    %v1212 = vmul.f32 %v1192, %v1192
    %v1213 = vsub.f32 %v1211, %v1212
    %v1214 = vmax.f32 %v1213, 0.0
    %v1215 = vsel %vm868, %v1185, %v1192
    %v1216 = vsel %vm869, %v1185, %v1192
    %v1217 = vsel %vm868, %v1203, %v1214
    %v1218 = vsel %vm869, %v1203, %v1214
    %v1219 = vsub.f32 %v1169, %v1215
    %v1220 = vsub.f32 %v1174, %v1216
    %v1221 = vadd.f32 %v1217, 1e-05
    %v1222 = vadd.f32 %v1218, 1e-05
    %v1223 = vrsqrt.pop %v1221
    %v1224 = vrsqrt.pop %v1222
    %v1225 = vmul.f32 %v1219, %v1223
    %v1226 = vmul.f32 %v1220, %v1224
    %v1227 = vlaneseq
    %v1228 = vshrl.u32 %v1227, 7
    %v1229 = vsub.s32 0, %v1228
    %v1230 = vrot.slane %v1177, %v1229
    %v1231 = vmul.f32 %v1225, %v1230
    %v1232 = vmul.f32 %v1226, %v1230
    %v1233 = vlaneseq
    %v1234 = vshrl.u32 %v1233, 7
    %v1235 = vsub.s32 0, %v1234
    %v1236 = vrot.slane %v1178, %v1235
    %v1237 = vadd.f32 %v1231, %v1236
    %v1238 = vadd.f32 %v1232, %v1236
    %v1239 = vmax.f32 %v1237, 0.0
    %v1240 = vmax.f32 %v1238, 0.0
    %v1241 = vld [vmem:[%s9] sm:$0xff]
    %v1242 = vld [vmem:[%s9 + $0x8] sm:$0xff]
    %v1243 = vld [vmem:[%s9 + $0x10] sm:$0xff]
    %v1244 = vld [vmem:[%s9 + $0x18] sm:$0xff]
    %v1245 = vld [vmem:[%s9 + $0x20] sm:$0xff]
    %v1246 = vld [vmem:[%s9 + $0x28] sm:$0xff]
    %v1247 = vld [vmem:[%s9 + $0x30] sm:$0xff]
    %v1248 = vld [vmem:[%s9 + $0x38] sm:$0xff]
    %v1249 = vld [vmem:[%s9 + $0x40] sm:$0xff]
    %v1250 = vld [vmem:[%s9 + $0x48] sm:$0xff]
    %v1251 = vld [vmem:[%s9 + $0x50] sm:$0xff]
    %v1252 = vld [vmem:[%s9 + $0x58] sm:$0xff]
    %v1253 = vld [vmem:[%s9 + $0x60] sm:$0xff]
    %v1254 = vld [vmem:[%s9 + $0x68] sm:$0xff]
    %v1255 = vld [vmem:[%s9 + $0x70] sm:$0xff]
    %v1256 = vld [vmem:[%s9 + $0x78] sm:$0xff]
    %v1257 = vld [vmem:[%s10] sm:$0x1]
    %v1259 = vlaneseq
    %v1260 = vshrl.u32 %v1259, 7
    %v1261 = vsub.s32 0, %v1260
    %v1262 = vrot.slane %v1257, %v1261
    %1264 = vmatprep.subr.mxu0 0.0
    %1265 = vmatpush1.msra.mxu0 %v1256
    %1266 = vmatprep.subr.mxu0 0.0
    %1267 = vmatpush1.msra.mxu0 %v1255
    %1268 = vmatprep.subr.mxu0 0.0
    %1269 = vmatpush1.msra.mxu0 %v1254
    %1270 = vmatprep.subr.mxu0 0.0
    %1271 = vmatpush1.msra.mxu0 %v1253
    %1272 = vmatprep.subr.mxu0 0.0
    %1273 = vmatpush1.msra.mxu0 %v1252
    %1274 = vmatprep.subr.mxu0 0.0
    %1275 = vmatpush1.msra.mxu0 %v1251
    %1276 = vmatprep.subr.mxu0 0.0
    %1277 = vmatpush1.msra.mxu0 %v1250
    %1278 = vmatprep.subr.mxu0 0.0
    %1279 = vmatpush1.msra.mxu0 %v1249
    %1280 = vmatprep.subr.mxu0 0.0
    %1281 = vmatpush1.msra.mxu0 %v1248
    %1282 = vmatprep.subr.mxu0 0.0
    %1283 = vmatpush1.msra.mxu0 %v1247
    %1284 = vmatprep.subr.mxu0 0.0
    %1285 = vmatpush1.msra.mxu0 %v1246
    %1286 = vmatprep.subr.mxu0 0.0
    %1287 = vmatpush1.msra.mxu0 %v1245
    %1288 = vmatprep.subr.mxu0 0.0
    %1289 = vmatpush1.msra.mxu0 %v1244
    %1290 = vmatprep.subr.mxu0 0.0
    %1291 = vmatpush1.msra.mxu0 %v1243
    %1292 = vmatprep.subr.mxu0 0.0
    %1293 = vmatpush1.msra.mxu0 %v1242
    %1294 = vmatprep.subr.mxu0 0.0
    %1295 = vmatpush1.msra.mxu0 %v1241
    %1296 = vmatprep.subr.mxu0 0.0
    %1297 = vmatpush2.msra.mxu0 0.0
    %1298 = vmatprep.subr.mxu0 0.0
    %1299 = vmatpush2.msra.mxu0 0.0
    %1300 = vmatprep.subr.mxu0 0.0
    %1301 = vmatpush2.msra.mxu0 0.0
    %1302 = vmatprep.subr.mxu0 0.0
    %1303 = vmatpush2.msra.mxu0 0.0
    %1304 = vmatprep.subr.mxu0 0.0
    %1305 = vmatpush2.msra.mxu0 0.0
    %1306 = vmatprep.subr.mxu0 0.0
    %1307 = vmatpush2.msra.mxu0 0.0
    %1308 = vmatprep.subr.mxu0 0.0
    %1309 = vmatpush2.msra.mxu0 0.0
    %1310 = vmatprep.subr.mxu0 0.0
    %1311 = vmatpush2.msra.mxu0 0.0
    %1312 = vmatprep.subr.mxu0 0.0
    %1313 = vmatpush2.msra.mxu0 0.0
    %1314 = vmatprep.subr.mxu0 0.0
    %1315 = vmatpush2.msra.mxu0 0.0
    %1316 = vmatprep.subr.mxu0 0.0
    %1317 = vmatpush2.msra.mxu0 0.0
    %1318 = vmatprep.subr.mxu0 0.0
    %1319 = vmatpush2.msra.mxu0 0.0
    %1320 = vmatprep.subr.mxu0 0.0
    %1321 = vmatpush2.msra.mxu0 0.0
    %1322 = vmatprep.subr.mxu0 0.0
    %1323 = vmatpush2.msra.mxu0 0.0
    %1324 = vmatprep.subr.mxu0 0.0
    %1325 = vmatpush2.msra.mxu0 0.0
    %1326 = vmatprep.subr.mxu0 0.0
    %1327 = vmatpush2.msra.mxu0 0.0
    %1328 = vmatprep.mubr.f32.mxu0 0.0
    %1329 = vmatmul.mubr.f32.gmra.mxu0 %v1239
    %v1330 = vpop.f32.mrf.mxu0
    %v1331 = vadd.f32 %v1262, %v1330
    %v1332 = vpop.f32.mrf.mxu0
    %1333 = vmatprep.mubr.f32.mxu0 0.0
    %1334 = vmatmul.mubr.f32.gmra.mxu0 %v1240
    %v1335 = vpop.f32.mrf.mxu0
    %v1336 = vadd.f32 %v1262, %v1335
    %v1337 = vpop.f32.mrf.mxu0
    %1338 = vdwg.mxu0
    %v1339 = vmul.f32 %v1331, %v1331
    %1340 = vadd.xlane.f32.xlu0 %v1339
    %v1341 = vpop.xlane.xlu0 %1340
    %v1342 = vmax.f32 %v1341, 1e-24
    %v1343 = vrsqrt.pop %v1342
    %v1344 = vmul.f32 %v1331, %v1343
    %v1345 = vmul.f32 %v1079, %v1079
    %1346 = vadd.xlane.f32.xlu0 %v1345
    %v1347 = vpop.xlane.xlu0 %1346
    %v1348 = vmax.f32 %v1347, 1e-24
    %v1349 = vrsqrt.pop %v1348
    %v1350 = vmul.f32 %v1079, %v1349
    %v1351 = vmul.f32 %v1344, %v1350
    %1352 = vadd.xlane.f32.xlu0 %v1351
    %v1353 = vpop.xlane.xlu0 %1352
    %vm1354 = vcmask 7168
    %v1355 = vsel %vm1354, %v1353, 0.0
    %1356 = vadd.xlane.f32.xlu0 %v1355
    %v1357 = vpop.xlane.xlu0 %1356
    %v1358 = vrot.slane %v1357, 4
    %v1359 = vadd.f32 %v1357, %v1358
    %v1360 = vrot.slane %v1359, 2
    %v1361 = vadd.f32 %v1359, %v1360
    %v1362 = vrot.slane %v1361, 1
    %v1363 = vadd.f32 %v1361, %v1362
    %s1364 = vtos %v1363
    %v1365 = vrcp.pop 8.0
    %s1366 = vtos %v1365
    %s1367 = smul.f32 %s1364, %s1366
    %s1368 = smul.f32 %s1367, 2.0
    %s1369 = ssub.f32 2.0, %s1368
    %s1370 = smul.f32 %s1369, 0.5
    %v1371 = vmul.f32 %v1336, %v1336
    %1372 = vadd.xlane.f32.xlu0 %v1371
    %v1373 = vpop.xlane.xlu0 %1372
    %v1374 = vmax.f32 %v1373, 1e-24
    %v1375 = vrsqrt.pop %v1374
    %v1376 = vmul.f32 %v1336, %v1375
    %v1377 = vmul.f32 %v1073, %v1073
    %1378 = vadd.xlane.f32.xlu0 %v1377
    %v1379 = vpop.xlane.xlu0 %1378
    %v1380 = vmax.f32 %v1379, 1e-24
    %v1381 = vrsqrt.pop %v1380
    %v1382 = vmul.f32 %v1073, %v1381
    %v1383 = vmul.f32 %v1376, %v1382
    %1384 = vadd.xlane.f32.xlu0 %v1383
    %v1385 = vpop.xlane.xlu0 %1384
    %v1386 = vsel %vm1354, %v1385, 0.0
    %1387 = vadd.xlane.f32.xlu0 %v1386
    %v1388 = vpop.xlane.xlu0 %1387
    %v1389 = vrot.slane %v1388, 4
    %v1390 = vadd.f32 %v1388, %v1389
    %v1391 = vrot.slane %v1390, 2
    %v1392 = vadd.f32 %v1390, %v1391
    %v1393 = vrot.slane %v1392, 1
    %v1394 = vadd.f32 %v1392, %v1393
    %s1395 = vtos %v1394
    %v1396 = vrcp.pop 8.0
    %s1397 = vtos %v1396
    %s1398 = smul.f32 %s1395, %s1397
    %s1399 = smul.f32 %s1398, 2.0
    %s1400 = ssub.f32 2.0, %s1399
    %s1401 = smul.f32 %s1400, 0.5
    %s1402 = sadd.f32 %s1370, %s1401
    %s1403 = scalar_lea.smem [#allocation2], 0
    %1404 = sst [smem:[%s1403]] %s1402
    // Predicated region
    $region46: #{byol_forward.1} parent=1 // pred_check
      _
    $region47: #{byol_forward.1} parent=1 // pred_check_branch
      %1406 = sbr.rel (0) target = $region49
    $region48: #{byol_forward.1} parent=1 // pred_region
      %s1408 = ssub.s32 16, 16
      %1409 = vsyncadd [#allocation3], %s1408
      %1412 = dma.smem_to_hbm [#allocation2], 16, %s11, [#allocation3]
    $region49: #{byol_forward.1} parent=1 // pred_fallthru
      _
    // Predicated region
    $region50: #{byol_forward.1} parent=1 // pred_check
      _
    $region51: #{byol_forward.1} parent=1 // pred_check_branch
      %1414 = sbr.rel (0) target = $region53
    $region52: #{byol_forward.1} parent=1 // pred_region
      %1415 = dma.done [#allocation3], 16
    $region53: #{byol_forward.1} parent=1 // pred_fallthru
      _
    %1416 = sfence
    %1417 = vsyncpa [#allocation3], 1

</llo_original>
